<compile_context>
chip_gen: v5e
topology: v5e:2x2
jax: 0.10.0
libtpu: 0.0.40
codegen_flags: <defaults>
</compile_context>

<pallas_src>
import functools
import math

import jax
import jax.numpy as jnp
from jax import lax
from jax.experimental import pallas as pl
from jax.experimental.pallas import tpu as pltpu


# ----------------------------------------------------------------------------
# Packed-vector row indices (all d-sized per-layer vectors in one tensor)
# ----------------------------------------------------------------------------
_VEC_SA_BQ, _VEC_SA_BK, _VEC_SA_BV, _VEC_SA_BO = 0, 1, 2, 3
_VEC_CA_BQ, _VEC_CA_BK, _VEC_CA_BV, _VEC_CA_BO = 4, 5, 6, 7
_VEC_B2 = 8
_VEC_G1, _VEC_BE1, _VEC_G2, _VEC_BE2, _VEC_G3, _VEC_BE3 = 9, 10, 11, 12, 13, 14
_NUM_VEC = 16  # padded to 16 rows


# ----------------------------------------------------------------------------
# Shared math (pure jnp; used inside the Pallas kernel AND by the packed ref)
# ----------------------------------------------------------------------------
def _layernorm_rows(x, gamma, beta, eps=1e-5):
    mu = jnp.mean(x, axis=-1, keepdims=True)
    var = jnp.mean((x - mu) ** 2, axis=-1, keepdims=True)
    return (x - mu) * lax.rsqrt(var + eps) * gamma + beta


def _matmul(x, w, bias=None, *, compute_dtype):
    """x: (R, Din), w: (Din, Dout).  bf16 inputs, f32 accumulation."""
    y = jnp.dot(x.astype(compute_dtype), w.astype(compute_dtype),
                preferred_element_type=jnp.float32)
    if bias is not None:
        y = y + bias
    return y


def _attend_rows(q, k, v, *, nhead, nb, causal, compute_dtype, recip):
    """Multi-head attention on row-major activations.

    q: (nb*Lq, D) f32, k/v: (nb*Ls, D) f32.  All heads processed in ONE batched
    score matmul and ONE batched PV matmul (batch dim = nhead*nb)."""
    rq, D = q.shape
    Lq = rq // nb
    Ls = k.shape[0] // nb
    dh = D // nhead
    scale = 1.0 / math.sqrt(dh)

    q3 = (q * scale).reshape(nb, Lq, D).astype(compute_dtype)
    k3 = k.reshape(nb, Ls, D).astype(compute_dtype)
    v3 = v.reshape(nb, Ls, D).astype(compute_dtype)

    # Gather per-head lane slices into a single leading batch axis g = h*nb + b.
    qh = jnp.concatenate([q3[:, :, h * dh:(h + 1) * dh] for h in range(nhead)], axis=0)
    kh = jnp.concatenate([k3[:, :, h * dh:(h + 1) * dh] for h in range(nhead)], axis=0)
    vh = jnp.concatenate([v3[:, :, h * dh:(h + 1) * dh] for h in range(nhead)], axis=0)

    s = jnp.einsum("gtd,gsd->gts", qh, kh,
                   preferred_element_type=jnp.float32)          # (G, Lq, Ls) f32

    if causal:
        # Hoisted causal mask: built once in 2D, applied additively (broadcast over G).
        row = lax.broadcasted_iota(jnp.int32, (Lq, Ls), 0)
        col = lax.broadcasted_iota(jnp.int32, (Lq, Ls), 1)
        s = s + jnp.where(col > row, -1e30, 0.0)

    s = s - jnp.max(s, axis=-1, keepdims=True)
    p = jnp.exp(s)
    denom = jnp.sum(p, axis=-1, keepdims=True)
    p = (p * recip(denom)).astype(compute_dtype)

    o = jnp.einsum("gts,gsd->gtd", p, vh,
                   preferred_element_type=jnp.float32)          # (G, Lq, dh) f32

    # Un-batch heads back into the lane (feature) dim -> (nb*Lq, D)
    o = jnp.concatenate(
        [o[h * nb:(h + 1) * nb].reshape(nb * Lq, dh) for h in range(nhead)], axis=-1)
    return o


def _layer_rows(x, mem, mats, vec, b1, *, nhead, nb, causal, compute_dtype, recip):
    """One decoder layer on row-major activations x: (nb*T, D), mem: (nb*S, D)."""
    w_sa_qkv, w_sa_o, w_ca_q, w_ca_kv, w_ca_o, w_ff1, w_ff2 = mats
    D = x.shape[-1]

    def vrow(i):
        return vec[i:i + 1, :]            # (1, D)

    # ---- self-attention block (fused QKV: one wide matmul) ----
    qkv = _matmul(x, w_sa_qkv, compute_dtype=compute_dtype)     # (R, 3D)
    q = qkv[:, 0:D] + vrow(_VEC_SA_BQ)
    k = qkv[:, D:2 * D] + vrow(_VEC_SA_BK)
    v = qkv[:, 2 * D:3 * D] + vrow(_VEC_SA_BV)
    att = _attend_rows(q, k, v, nhead=nhead, nb=nb, causal=causal,
                       compute_dtype=compute_dtype, recip=recip)
    sa = _matmul(att, w_sa_o, vrow(_VEC_SA_BO), compute_dtype=compute_dtype)
    x = _layernorm_rows(x + sa, vrow(_VEC_G1), vrow(_VEC_BE1))

    # ---- cross-attention block (fused KV projection of memory) ----
    q = _matmul(x, w_ca_q, vrow(_VEC_CA_BQ), compute_dtype=compute_dtype)
    kv = _matmul(mem, w_ca_kv, compute_dtype=compute_dtype)     # (Rm, 2D)
    k = kv[:, 0:D] + vrow(_VEC_CA_BK)
    v = kv[:, D:2 * D] + vrow(_VEC_CA_BV)
    att = _attend_rows(q, k, v, nhead=nhead, nb=nb, causal=False,
                       compute_dtype=compute_dtype, recip=recip)
    ca = _matmul(att, w_ca_o, vrow(_VEC_CA_BO), compute_dtype=compute_dtype)
    x = _layernorm_rows(x + ca, vrow(_VEC_G2), vrow(_VEC_BE2))

    # ---- feed-forward block ----
    h = jnp.maximum(_matmul(x, w_ff1, b1, compute_dtype=compute_dtype), 0.0)
    ff = _matmul(h, w_ff2, vrow(_VEC_B2), compute_dtype=compute_dtype)
    x = _layernorm_rows(x + ff, vrow(_VEC_G3), vrow(_VEC_BE3))
    return x


# ----------------------------------------------------------------------------
# Pallas kernel: whole layer stack, grid = (batch_blocks, num_layers)
# ----------------------------------------------------------------------------
def _stack_kernel(tgt_ref, mem_ref,
                  w_sa_qkv_ref, w_sa_o_ref, w_ca_q_ref, w_ca_kv_ref, w_ca_o_ref,
                  w_ff1_ref, w_ff2_ref, vec_ref, b1_ref,
                  out_ref, act_ref, *, nhead, tgt_is_causal, compute_dtype):
    layer = pl.program_id(1)
    last = pl.num_programs(1) - 1

    # Layer 0: load the target block into the resident f32 activation scratch.
    @pl.when(layer == 0)
    def _init():
        act_ref[...] = tgt_ref[...].astype(jnp.float32)

    bb, T, D = act_ref.shape
    S = mem_ref.shape[1]

    x = act_ref[...].reshape(bb * T, D)                      # (bb*T, D) f32
    # memory is already in compute dtype (wrapper cast); it only feeds the MXU.
    mem = mem_ref[...].reshape(bb * S, D)

    vec = vec_ref[0]                                         # (_NUM_VEC, D) f32
    b1 = b1_ref[0]                                           # (1, F) f32
    mats = (w_sa_qkv_ref[0], w_sa_o_ref[0], w_ca_q_ref[0], w_ca_kv_ref[0],
            w_ca_o_ref[0], w_ff1_ref[0], w_ff2_ref[0])

    x = _layer_rows(x, mem, mats, vec, b1, nhead=nhead, nb=bb,
                    causal=tgt_is_causal, compute_dtype=compute_dtype,
                    recip=lambda d: pl.reciprocal(d, approx=True))
    xr = x.reshape(bb, T, D)

    # Intermediate layers: keep the activations resident in VMEM.
    @pl.when(layer < last)
    def _carry():
        act_ref[...] = xr

    # Last layer: single lane-dense writeback to the HBM output block.
    @pl.when(layer == last)
    def _final():
        out_ref[...] = xr.astype(out_ref.dtype)


def hybrid_cross_attention_encoder(tgt, memory, packed, *, nhead,
                                   tgt_is_causal=True, batch_block=None,
                                   compute_dtype=jnp.bfloat16):
    """Pallas equivalent of HybridCrossAttentionEncoder.forward (batch-first).

    tgt: (B, T, D), memory: (B, S, D). Returns (output, memory)."""
    B, T, D = tgt.shape
    S = memory.shape[1]
    assert D % nhead == 0
    L = packed["w_sa_qkv"].shape[0]
    F = packed["w_ff1"].shape[-1]

    if batch_block is None:
        # Aim for >=128 rows per block so the MXU gets a real M dimension.
        bb = max(1, min(B, -(-128 // T)))
        while B % bb != 0:
            bb -= 1
        batch_block = bb
    assert B % batch_block == 0
    nb = B // batch_block

    def act_spec(seq):
        return pl.BlockSpec((batch_block, seq, D), lambda b, l: (b, 0, 0))

    def wspec(shape):
        return pl.BlockSpec((1,) + shape, lambda b, l: (l, 0, 0))

    in_specs = [
        act_spec(T),                 # tgt
        act_spec(S),                 # memory (compute dtype)
        wspec((D, 3 * D)),           # w_sa_qkv
        wspec((D, D)),               # w_sa_o
        wspec((D, D)),               # w_ca_q
        wspec((D, 2 * D)),           # w_ca_kv
        wspec((D, D)),               # w_ca_o
        wspec((D, F)),               # w_ff1
        wspec((F, D)),               # w_ff2
        wspec((_NUM_VEC, D)),        # packed bias / layernorm vectors
        wspec((1, F)),               # b1
    ]

    # memory only feeds the MXU -> ship it in compute dtype (halves its DMA,
    # removes in-kernel casts; numerically identical since f32->bf16 happens
    # anyway at the matmul input).
    mem_in = memory.astype(compute_dtype)

    # VMEM budget: double-buffered per-layer weight slab + activation blocks.
    per_layer_bytes = sum(int(packed[k][0].size) * packed[k].dtype.itemsize
                          for k in ("w_sa_qkv", "w_sa_o", "w_ca_q", "w_ca_kv",
                                    "w_ca_o", "w_ff1", "w_ff2", "vec", "b1"))
    act_bytes = (batch_block * T * D * (4 + tgt.dtype.itemsize)
                 + batch_block * S * D * mem_in.dtype.itemsize
                 + batch_block * T * D * tgt.dtype.itemsize)
    vmem_limit = int(min(64 * 1024 * 1024,
                         max(32 * 1024 * 1024, 4 * per_layer_bytes + 4 * act_bytes)))

    kernel = functools.partial(_stack_kernel, nhead=nhead,
                               tgt_is_causal=tgt_is_causal,
                               compute_dtype=compute_dtype)

    out = pl.pallas_call(
        kernel,
        out_shape=jax.ShapeDtypeStruct((B, T, D), tgt.dtype),
        grid=(nb, L),
        in_specs=in_specs,
        out_specs=act_spec(T),
        scratch_shapes=[pltpu.VMEM((batch_block, T, D), jnp.float32)],
        compiler_params=pltpu.CompilerParams(
            dimension_semantics=("parallel", "arbitrary"),
            vmem_limit_bytes=vmem_limit),
    )(tgt, mem_in, packed["w_sa_qkv"], packed["w_sa_o"], packed["w_ca_q"],
      packed["w_ca_kv"], packed["w_ca_o"], packed["w_ff1"], packed["w_ff2"],
      packed["vec"], packed["b1"])

    if packed.get("final_norm") is not None:
        g, b = packed["final_norm"]
        out = _layernorm_rows(out.astype(jnp.float32), g, b).astype(out.dtype)
    return out, memory


# ----------------------------------------------------------------------------
# Parameter init (PyTorch convention: y = x @ W.T + b) and packing
# ----------------------------------------------------------------------------
def _init_layer(key, d, ffn):
    ks = jax.random.split(key, 16)

    def w(k, shape, scale=0.05):
        return jax.random.normal(k, shape, jnp.float32) * scale

    return {
        "sa_wq": w(ks[0], (d, d)), "sa_wk": w(ks[1], (d, d)), "sa_wv": w(ks[2], (d, d)),
        "sa_bq": w(ks[3], (1, d), 0.01), "sa_bk": w(ks[4], (1, d), 0.01),
        "sa_bv": w(ks[5], (1, d), 0.01),
        "sa_wo": w(ks[6], (d, d)), "sa_bo": w(ks[7], (1, d), 0.01),
        "ca_wq": w(ks[8], (d, d)), "ca_wk": w(ks[9], (d, d)), "ca_wv": w(ks[10], (d, d)),
        "ca_bq": jnp.zeros((1, d), jnp.float32), "ca_bk": jnp.zeros((1, d), jnp.float32),
        "ca_bv": jnp.zeros((1, d), jnp.float32),
        "ca_wo": w(ks[11], (d, d)), "ca_bo": jnp.zeros((1, d), jnp.float32),
        "w1": w(ks[12], (ffn, d)), "b1": w(ks[13], (1, ffn), 0.01),
        "w2": w(ks[14], (d, ffn)), "b2": w(ks[15], (1, d), 0.01),
        "g1": jnp.ones((1, d), jnp.float32), "be1": jnp.zeros((1, d), jnp.float32),
        "g2": jnp.ones((1, d), jnp.float32), "be2": jnp.zeros((1, d), jnp.float32),
        "g3": jnp.ones((1, d), jnp.float32), "be3": jnp.zeros((1, d), jnp.float32),
    }


def init_params(key, d, ffn, num_layers):
    keys = jax.random.split(key, num_layers)
    return {"layers": [_init_layer(k, d, ffn) for k in keys],
            "final_norm": None}   # norm=None in the encoder constructor


def _pack_vecs(lp, d):
    rows = [lp["sa_bq"], lp["sa_bk"], lp["sa_bv"], lp["sa_bo"],
            lp["ca_bq"], lp["ca_bk"], lp["ca_bv"], lp["ca_bo"],
            lp["b2"], lp["g1"], lp["be1"], lp["g2"], lp["be2"], lp["g3"], lp["be3"]]
    rows = [r.reshape(1, d).astype(jnp.float32) for r in rows]
    while len(rows) < _NUM_VEC:
        rows.append(jnp.zeros((1, d), jnp.float32))
    return jnp.concatenate(rows, axis=0)


def pack_params(params, *, weight_dtype=jnp.bfloat16):
    layers = params["layers"]
    d = layers[0]["sa_wq"].shape[0]

    def stack(fn, dtype):
        return jnp.stack([fn(lp) for lp in layers], axis=0).astype(dtype)

    return {
        "w_sa_qkv": stack(lambda lp: jnp.concatenate(
            [lp["sa_wq"].T, lp["sa_wk"].T, lp["sa_wv"].T], axis=1), weight_dtype),
        "w_sa_o": stack(lambda lp: lp["sa_wo"].T, weight_dtype),
        "w_ca_q": stack(lambda lp: lp["ca_wq"].T, weight_dtype),
        "w_ca_kv": stack(lambda lp: jnp.concatenate(
            [lp["ca_wk"].T, lp["ca_wv"].T], axis=1), weight_dtype),
        "w_ca_o": stack(lambda lp: lp["ca_wo"].T, weight_dtype),
        "w_ff1": stack(lambda lp: lp["w1"].T, weight_dtype),
        "w_ff2": stack(lambda lp: lp["w2"].T, weight_dtype),
        "vec": stack(lambda lp: _pack_vecs(lp, d), jnp.float32),
        "b1": stack(lambda lp: lp["b1"], jnp.float32),
        "final_norm": params.get("final_norm"),
    }


# ----------------------------------------------------------------------------
# References
# ----------------------------------------------------------------------------
def ref_forward_packed(tgt, memory, packed, *, nhead, tgt_is_causal, compute_dtype):
    """Same math as the kernel (packed weights, bf16 matmuls, exact reciprocal)."""
    B, T, D = tgt.shape
    S = memory.shape[1]
    x = tgt.astype(jnp.float32).reshape(B * T, D)
    mem = memory.astype(jnp.float32).reshape(B * S, D)
    L = packed["w_sa_qkv"].shape[0]
    for l in range(L):
        mats = tuple(packed[k][l] for k in
                     ("w_sa_qkv", "w_sa_o", "w_ca_q", "w_ca_kv", "w_ca_o",
                      "w_ff1", "w_ff2"))
        x = _layer_rows(x, mem, mats, packed["vec"][l], packed["b1"][l],
                        nhead=nhead, nb=B, causal=tgt_is_causal,
                        compute_dtype=compute_dtype, recip=lambda d: 1.0 / d)
    out = x.reshape(B, T, D)
    if packed.get("final_norm") is not None:
        g, b = packed["final_norm"]
        out = _layernorm_rows(out, g, b)
    return out.astype(tgt.dtype), memory


def _ref_mha(q_in, k_in, v_in, wq, wk, wv, bq, bk, bv, wo, bo, *, nhead, causal):
    d = q_in.shape[-1]
    dh = d // nhead
    scale = 1.0 / math.sqrt(dh)
    q = q_in @ wq.T + bq
    k = k_in @ wk.T + bk
    v = v_in @ wv.T + bv
    outs = []
    for h in range(nhead):
        qh, kh, vh = (t[:, h * dh:(h + 1) * dh] for t in (q, k, v))
        s = (qh @ kh.T) * scale
        if causal:
            row = lax.broadcasted_iota(jnp.int32, s.shape, 0)
            col = lax.broadcasted_iota(jnp.int32, s.shape, 1)
            s = jnp.where(col > row, -jnp.inf, s)
        outs.append(jax.nn.softmax(s, axis=-1) @ vh)
    return jnp.concatenate(outs, axis=-1) @ wo.T + bo


def _ref_layer(x, mem, lp, nhead, causal):
    sa = _ref_mha(x, x, x, lp["sa_wq"], lp["sa_wk"], lp["sa_wv"],
                  lp["sa_bq"], lp["sa_bk"], lp["sa_bv"], lp["sa_wo"], lp["sa_bo"],
                  nhead=nhead, causal=causal)
    x = _layernorm_rows(x + sa, lp["g1"], lp["be1"])
    ca = _ref_mha(x, mem, mem, lp["ca_wq"], lp["ca_wk"], lp["ca_wv"],
                  lp["ca_bq"], lp["ca_bk"], lp["ca_bv"], lp["ca_wo"], lp["ca_bo"],
                  nhead=nhead, causal=False)
    x = _layernorm_rows(x + ca, lp["g2"], lp["be2"])
    h = jnp.maximum(x @ lp["w1"].T + lp["b1"], 0.0)
    ff = h @ lp["w2"].T + lp["b2"]
    return _layernorm_rows(x + ff, lp["g3"], lp["be3"])


def ref_forward_unpacked(tgt, memory, params, *, nhead, tgt_is_causal):
    """Independent f32 reference with original PyTorch-layout weights."""
    out = tgt
    for lp in params["layers"]:
        out = jax.vmap(lambda x, m, _lp=lp: _ref_layer(x, m, _lp, nhead,
                                                       tgt_is_causal))(out, memory)
    if params.get("final_norm") is not None:
        g, b = params["final_norm"]
        out = _layernorm_rows(out, g, b)
    return out, memory


# ----------------------------------------------------------------------------
if __name__ == "__main__":
    B, T, S, D, NHEAD, FFN, NLAYERS = 2, 8, 16, 32, 4, 64, 2

    key = jax.random.PRNGKey(0)
    k_tgt, k_mem, k_par = jax.random.split(key, 3)
    tgt = jax.random.normal(k_tgt, (B, T, D), jnp.float32)
    memory = jax.random.normal(k_mem, (B, S, D), jnp.float32)
    params = init_params(k_par, D, FFN, NLAYERS)
    packed = pack_params(params)

    # tgt_mask would be the causal mask -> _detect_is_causal_mask -> True
    out, mem_out = hybrid_cross_attention_encoder(
        tgt, memory, packed, nhead=NHEAD, tgt_is_causal=True)
    out = jax.block_until_ready(out)
    assert out.shape == (B, T, D) and out.dtype == tgt.dtype

    # Tight check: identical math path in pure JAX (same packed bf16 weights).
    ref1, _ = ref_forward_packed(tgt, memory, packed, nhead=NHEAD,
                                 tgt_is_causal=True, compute_dtype=jnp.bfloat16)
    err1 = float(jnp.max(jnp.abs(out.astype(jnp.float32) - ref1.astype(jnp.float32))))
    assert jnp.allclose(out.astype(jnp.float32), ref1.astype(jnp.float32),
                        atol=5e-3, rtol=3e-2), f"tight check max err {err1}"

    # Loose check: independent f32 reference with original (PyTorch-layout) params.
    ref2, _ = ref_forward_unpacked(tgt, memory, params, nhead=NHEAD,
                                   tgt_is_causal=True)
    err2 = float(jnp.max(jnp.abs(out.astype(jnp.float32) - ref2)))
    assert jnp.allclose(out.astype(jnp.float32), ref2,
                        atol=5e-2, rtol=5e-2), f"loose check max err {err2}"

    print("KERNEL_OK")
</pallas_src>

<mosaic_0001>
module attributes {stable_mosaic.version = 11 : i64} {
  func.func @_stack_kernel(%arg0: i32, %arg1: i32, %arg2: memref<2x8x32xf32, #tpu.memory_space<vmem>>, %arg3: memref<2x16x32xbf16, #tpu.memory_space<vmem>>, %arg4: memref<1x32x96xbf16, #tpu.memory_space<vmem>>, %arg5: memref<1x32x32xbf16, #tpu.memory_space<vmem>>, %arg6: memref<1x32x32xbf16, #tpu.memory_space<vmem>>, %arg7: memref<1x32x64xbf16, #tpu.memory_space<vmem>>, %arg8: memref<1x32x32xbf16, #tpu.memory_space<vmem>>, %arg9: memref<1x32x64xbf16, #tpu.memory_space<vmem>>, %arg10: memref<1x64x32xbf16, #tpu.memory_space<vmem>>, %arg11: memref<1x16x32xf32, #tpu.memory_space<vmem>>, %arg12: memref<1x1x64xf32, #tpu.memory_space<vmem>>, %arg13: memref<2x8x32xf32, #tpu.memory_space<vmem>>, %arg14: memref<2x8x32xf32, #tpu.memory_space<vmem>>) attributes {dimension_semantics = [#tpu.dimension_semantics<parallel>, #tpu.dimension_semantics<arbitrary>], iteration_bounds = array<i64: 1, 2>, scalar_prefetch = 0 : i64, scratch_operands = 1 : i64, tpu.core_type = #tpu.core_type<tc>, window_params = [{transform_indices = @transform_0, window_bounds = array<i64: 2, 8, 32>}, {transform_indices = @transform_1, window_bounds = array<i64: 2, 16, 32>}, {transform_indices = @transform_2, window_bounds = array<i64: 1, 32, 96>}, {transform_indices = @transform_3, window_bounds = array<i64: 1, 32, 32>}, {transform_indices = @transform_4, window_bounds = array<i64: 1, 32, 32>}, {transform_indices = @transform_5, window_bounds = array<i64: 1, 32, 64>}, {transform_indices = @transform_6, window_bounds = array<i64: 1, 32, 32>}, {transform_indices = @transform_7, window_bounds = array<i64: 1, 32, 64>}, {transform_indices = @transform_8, window_bounds = array<i64: 1, 64, 32>}, {transform_indices = @transform_9, window_bounds = array<i64: 1, 16, 32>}, {transform_indices = @transform_10, window_bounds = array<i64: 1, 1, 64>}, {transform_indices = @transform_11, window_bounds = array<i64: 2, 8, 32>}]} {
    %c0_i32 = arith.constant 0 : i32
    %0 = arith.cmpi eq, %arg1, %c0_i32 : i32
    %1 = arith.extui %0 : i1 to i32
    %c0_i32_0 = arith.constant 0 : i32
    %2 = arith.cmpi ne, %1, %c0_i32_0 : i32
    scf.if %2 {
      %c0_70 = arith.constant 0 : index
      %c0_71 = arith.constant 0 : index
      %c0_72 = arith.constant 0 : index
      %255 = vector.load %arg2[%c0_70, %c0_71, %c0_72] : memref<2x8x32xf32, #tpu.memory_space<vmem>>, vector<2x8x32xf32>
      %c0_73 = arith.constant 0 : index
      %c0_74 = arith.constant 0 : index
      %c0_75 = arith.constant 0 : index
      %256 = vector.load %arg14[%c0_73, %c0_74, %c0_75] : memref<2x8x32xf32, #tpu.memory_space<vmem>>, vector<2x8x32xf32>
      tpu.vector_store %arg14[%c0_73, %c0_74, %c0_75], %255 {strides = array<i32>} : memref<2x8x32xf32, #tpu.memory_space<vmem>>, vector<2x8x32xf32>,
    } else {
    }
    %c0 = arith.constant 0 : index
    %c0_1 = arith.constant 0 : index
    %c0_2 = arith.constant 0 : index
    %3 = vector.load %arg14[%c0, %c0_1, %c0_2] : memref<2x8x32xf32, #tpu.memory_space<vmem>>, vector<2x8x32xf32>
    %4 = vector.shape_cast %3 : vector<2x8x32xf32> to vector<16x32xf32>
    %c0_3 = arith.constant 0 : index
    %c0_4 = arith.constant 0 : index
    %c0_5 = arith.constant 0 : index
    %5 = vector.load %arg3[%c0_3, %c0_4, %c0_5] : memref<2x16x32xbf16, #tpu.memory_space<vmem>>, vector<2x16x32xbf16>
    %6 = vector.shape_cast %5 : vector<2x16x32xbf16> to vector<32x32xbf16>
    %c0_6 = arith.constant 0 : index
    %c0_7 = arith.constant 0 : index
    %c0_8 = arith.constant 0 : index
    %7 = vector.load %arg11[%c0_6, %c0_7, %c0_8] : memref<1x16x32xf32, #tpu.memory_space<vmem>>, vector<1x16x32xf32>
    %8 = vector.shape_cast %7 : vector<1x16x32xf32> to vector<16x32xf32>
    %c0_9 = arith.constant 0 : index
    %c0_10 = arith.constant 0 : index
    %c0_11 = arith.constant 0 : index
    %9 = vector.load %arg12[%c0_9, %c0_10, %c0_11] : memref<1x1x64xf32, #tpu.memory_space<vmem>>, vector<1x1x64xf32>
    %10 = vector.shape_cast %9 : vector<1x1x64xf32> to vector<1x64xf32>
    %c0_12 = arith.constant 0 : index
    %c0_13 = arith.constant 0 : index
    %c0_14 = arith.constant 0 : index
    %11 = vector.load %arg4[%c0_12, %c0_13, %c0_14] : memref<1x32x96xbf16, #tpu.memory_space<vmem>>, vector<1x32x96xbf16>
    %12 = vector.shape_cast %11 : vector<1x32x96xbf16> to vector<32x96xbf16>
    %c0_15 = arith.constant 0 : index
    %c0_16 = arith.constant 0 : index
    %c0_17 = arith.constant 0 : index
    %13 = vector.load %arg5[%c0_15, %c0_16, %c0_17] : memref<1x32x32xbf16, #tpu.memory_space<vmem>>, vector<1x32x32xbf16>
    %14 = vector.shape_cast %13 : vector<1x32x32xbf16> to vector<32x32xbf16>
    %c0_18 = arith.constant 0 : index
    %c0_19 = arith.constant 0 : index
    %c0_20 = arith.constant 0 : index
    %15 = vector.load %arg6[%c0_18, %c0_19, %c0_20] : memref<1x32x32xbf16, #tpu.memory_space<vmem>>, vector<1x32x32xbf16>
    %16 = vector.shape_cast %15 : vector<1x32x32xbf16> to vector<32x32xbf16>
    %c0_21 = arith.constant 0 : index
    %c0_22 = arith.constant 0 : index
    %c0_23 = arith.constant 0 : index
    %17 = vector.load %arg7[%c0_21, %c0_22, %c0_23] : memref<1x32x64xbf16, #tpu.memory_space<vmem>>, vector<1x32x64xbf16>
    %18 = vector.shape_cast %17 : vector<1x32x64xbf16> to vector<32x64xbf16>
    %c0_24 = arith.constant 0 : index
    %c0_25 = arith.constant 0 : index
    %c0_26 = arith.constant 0 : index
    %19 = vector.load %arg8[%c0_24, %c0_25, %c0_26] : memref<1x32x32xbf16, #tpu.memory_space<vmem>>, vector<1x32x32xbf16>
    %20 = vector.shape_cast %19 : vector<1x32x32xbf16> to vector<32x32xbf16>
    %c0_27 = arith.constant 0 : index
    %c0_28 = arith.constant 0 : index
    %c0_29 = arith.constant 0 : index
    %21 = vector.load %arg9[%c0_27, %c0_28, %c0_29] : memref<1x32x64xbf16, #tpu.memory_space<vmem>>, vector<1x32x64xbf16>
    %22 = vector.shape_cast %21 : vector<1x32x64xbf16> to vector<32x64xbf16>
    %c0_30 = arith.constant 0 : index
    %c0_31 = arith.constant 0 : index
    %c0_32 = arith.constant 0 : index
    %23 = vector.load %arg10[%c0_30, %c0_31, %c0_32] : memref<1x64x32xbf16, #tpu.memory_space<vmem>>, vector<1x64x32xbf16>
    %24 = vector.shape_cast %23 : vector<1x64x32xbf16> to vector<64x32xbf16>
    %25 = arith.truncf %4 : vector<16x32xf32> to vector<16x32xbf16>
    %cst = arith.constant dense<0.000000e+00> : vector<16x96xf32>
    %26 = tpu.matmul %25, %12, %cst {dimension_numbers = #tpu.dot_dimension_numbers<[1], [0], [0], [1], [0, 0, 1, 1], [], []>} : vector<16x32xbf16>, vector<32x96xbf16>, vector<16x96xf32> -> vector<16x96xf32>
    %27 = vector.extract_strided_slice %26 {offsets = [0, 0], sizes = [16, 32], strides = [1, 1]} : vector<16x96xf32> to vector<16x32xf32>
    %28 = vector.extract_strided_slice %8 {offsets = [0, 0], sizes = [1, 32], strides = [1, 1]} : vector<16x32xf32> to vector<1x32xf32>
    %29 = vector.broadcast %28 : vector<1x32xf32> to vector<16x32xf32>
    %30 = arith.addf %27, %29 : vector<16x32xf32>
    %31 = vector.extract_strided_slice %26 {offsets = [0, 32], sizes = [16, 32], strides = [1, 1]} : vector<16x96xf32> to vector<16x32xf32>
    %32 = vector.extract_strided_slice %8 {offsets = [1, 0], sizes = [1, 32], strides = [1, 1]} : vector<16x32xf32> to vector<1x32xf32>
    %33 = vector.broadcast %32 : vector<1x32xf32> to vector<16x32xf32>
    %34 = arith.addf %31, %33 : vector<16x32xf32>
    %35 = vector.extract_strided_slice %26 {offsets = [0, 64], sizes = [16, 32], strides = [1, 1]} : vector<16x96xf32> to vector<16x32xf32>
    %36 = vector.extract_strided_slice %8 {offsets = [2, 0], sizes = [1, 32], strides = [1, 1]} : vector<16x32xf32> to vector<1x32xf32>
    %37 = vector.broadcast %36 : vector<1x32xf32> to vector<16x32xf32>
    %38 = arith.addf %35, %37 : vector<16x32xf32>
    %cst_33 = arith.constant 0.353553385 : f32
    %39 = vector.broadcast %cst_33 : f32 to vector<16x32xf32>
    %40 = arith.mulf %30, %39 : vector<16x32xf32>
    %41 = vector.shape_cast %40 : vector<16x32xf32> to vector<2x8x32xf32>
    %42 = arith.truncf %41 : vector<2x8x32xf32> to vector<2x8x32xbf16>
    %43 = vector.shape_cast %34 : vector<16x32xf32> to vector<2x8x32xf32>
    %44 = arith.truncf %43 : vector<2x8x32xf32> to vector<2x8x32xbf16>
    %45 = vector.shape_cast %38 : vector<16x32xf32> to vector<2x8x32xf32>
    %46 = arith.truncf %45 : vector<2x8x32xf32> to vector<2x8x32xbf16>
    %47 = vector.extract_strided_slice %42 {offsets = [0, 0, 0], sizes = [2, 8, 8], strides = [1, 1, 1]} : vector<2x8x32xbf16> to vector<2x8x8xbf16>
    %48 = vector.extract_strided_slice %42 {offsets = [0, 0, 8], sizes = [2, 8, 8], strides = [1, 1, 1]} : vector<2x8x32xbf16> to vector<2x8x8xbf16>
    %49 = vector.extract_strided_slice %42 {offsets = [0, 0, 16], sizes = [2, 8, 8], strides = [1, 1, 1]} : vector<2x8x32xbf16> to vector<2x8x8xbf16>
    %50 = vector.extract_strided_slice %42 {offsets = [0, 0, 24], sizes = [2, 8, 8], strides = [1, 1, 1]} : vector<2x8x32xbf16> to vector<2x8x8xbf16>
    %51 = tpu.concatenate %47, %48, %49, %50 in 0 : vector<2x8x8xbf16>, vector<2x8x8xbf16>, vector<2x8x8xbf16>, vector<2x8x8xbf16> -> vector<8x8x8xbf16>
    %52 = vector.extract_strided_slice %44 {offsets = [0, 0, 0], sizes = [2, 8, 8], strides = [1, 1, 1]} : vector<2x8x32xbf16> to vector<2x8x8xbf16>
    %53 = vector.extract_strided_slice %44 {offsets = [0, 0, 8], sizes = [2, 8, 8], strides = [1, 1, 1]} : vector<2x8x32xbf16> to vector<2x8x8xbf16>
    %54 = vector.extract_strided_slice %44 {offsets = [0, 0, 16], sizes = [2, 8, 8], strides = [1, 1, 1]} : vector<2x8x32xbf16> to vector<2x8x8xbf16>
    %55 = vector.extract_strided_slice %44 {offsets = [0, 0, 24], sizes = [2, 8, 8], strides = [1, 1, 1]} : vector<2x8x32xbf16> to vector<2x8x8xbf16>
    %56 = tpu.concatenate %52, %53, %54, %55 in 0 : vector<2x8x8xbf16>, vector<2x8x8xbf16>, vector<2x8x8xbf16>, vector<2x8x8xbf16> -> vector<8x8x8xbf16>
    %57 = vector.extract_strided_slice %46 {offsets = [0, 0, 0], sizes = [2, 8, 8], strides = [1, 1, 1]} : vector<2x8x32xbf16> to vector<2x8x8xbf16>
    %58 = vector.extract_strided_slice %46 {offsets = [0, 0, 8], sizes = [2, 8, 8], strides = [1, 1, 1]} : vector<2x8x32xbf16> to vector<2x8x8xbf16>
    %59 = vector.extract_strided_slice %46 {offsets = [0, 0, 16], sizes = [2, 8, 8], strides = [1, 1, 1]} : vector<2x8x32xbf16> to vector<2x8x8xbf16>
    %60 = vector.extract_strided_slice %46 {offsets = [0, 0, 24], sizes = [2, 8, 8], strides = [1, 1, 1]} : vector<2x8x32xbf16> to vector<2x8x8xbf16>
    %61 = tpu.concatenate %57, %58, %59, %60 in 0 : vector<2x8x8xbf16>, vector<2x8x8xbf16>, vector<2x8x8xbf16>, vector<2x8x8xbf16> -> vector<8x8x8xbf16>
    "tpu.trace_start"() <{level = 10 : i32, message = "gtd,gsd->gts"}> : () -> ()
    %cst_34 = arith.constant dense<0.000000e+00> : vector<8x8x8xf32>
    %62 = tpu.matmul %51, %56, %cst_34 {dimension_numbers = #tpu.dot_dimension_numbers<[2], [2], [1], [1], [0, 0, 0, 1, 1, 1], [0], [0]>} : vector<8x8x8xbf16>, vector<8x8x8xbf16>, vector<8x8x8xf32> -> vector<8x8x8xf32>
    "tpu.trace_stop"() : () -> ()
    %63 = tpu.iota {dimensions = array<i32: 0>} : vector<8x8xi32>
    %64 = tpu.iota {dimensions = array<i32: 1>} : vector<8x8xi32>
    %65 = arith.cmpi sgt, %64, %63 : vector<8x8xi32>
    %cst_35 = arith.constant -1.000000e+30 : f32
    %cst_36 = arith.constant 0.000000e+00 : f32
    %66 = vector.broadcast %cst_35 : f32 to vector<8x8xf32>
    %67 = vector.broadcast %cst_36 : f32 to vector<8x8xf32>
    %68 = arith.select %65, %66, %67 : vector<8x8xi1>, vector<8x8xf32>
    %69 = vector.shape_cast %68 : vector<8x8xf32> to vector<1x8x8xf32>
    %70 = vector.broadcast %69 : vector<1x8x8xf32> to vector<8x8x8xf32>
    %71 = arith.addf %62, %70 : vector<8x8x8xf32>
    %cst_37 = arith.constant dense<0xFF800000> : vector<8x8xf32>
    %72 = vector.multi_reduction <maximumf>, %71, %cst_37 [2] : vector<8x8x8xf32> to vector<8x8xf32>
    %73 = vector.shape_cast %72 : vector<8x8xf32> to vector<8x8x1xf32>
    %74 = vector.broadcast %73 : vector<8x8x1xf32> to vector<8x8x8xf32>
    %75 = arith.subf %71, %74 : vector<8x8x8xf32>
    %76 = math.exp %75 : vector<8x8x8xf32>
    %cst_38 = arith.constant dense<0.000000e+00> : vector<8x8xf32>
    %77 = vector.multi_reduction <add>, %76, %cst_38 [2] : vector<8x8x8xf32> to vector<8x8xf32>
    %78 = vector.shape_cast %77 : vector<8x8xf32> to vector<8x8x1xf32>
    %79 = tpu.reciprocal %78 {approx = true} : vector<8x8x1xf32> -> vector<8x8x1xf32>
    %80 = vector.broadcast %79 : vector<8x8x1xf32> to vector<8x8x8xf32>
    %81 = arith.mulf %76, %80 : vector<8x8x8xf32>
    %82 = arith.truncf %81 : vector<8x8x8xf32> to vector<8x8x8xbf16>
    "tpu.trace_start"() <{level = 10 : i32, message = "gts,gsd->gtd"}> : () -> ()
    %cst_39 = arith.constant dense<0.000000e+00> : vector<8x8x8xf32>
    %83 = tpu.matmul %82, %61, %cst_39 {dimension_numbers = #tpu.dot_dimension_numbers<[2], [1], [1], [2], [0, 0, 0, 1, 1, 2], [0], [0]>} : vector<8x8x8xbf16>, vector<8x8x8xbf16>, vector<8x8x8xf32> -> vector<8x8x8xf32>
    "tpu.trace_stop"() : () -> ()
    %84 = vector.extract_strided_slice %83 {offsets = [0, 0, 0], sizes = [2, 8, 8], strides = [1, 1, 1]} : vector<8x8x8xf32> to vector<2x8x8xf32>
    %85 = vector.shape_cast %84 : vector<2x8x8xf32> to vector<16x8xf32>
    %86 = vector.extract_strided_slice %83 {offsets = [2, 0, 0], sizes = [2, 8, 8], strides = [1, 1, 1]} : vector<8x8x8xf32> to vector<2x8x8xf32>
    %87 = vector.shape_cast %86 : vector<2x8x8xf32> to vector<16x8xf32>
    %88 = vector.extract_strided_slice %83 {offsets = [4, 0, 0], sizes = [2, 8, 8], strides = [1, 1, 1]} : vector<8x8x8xf32> to vector<2x8x8xf32>
    %89 = vector.shape_cast %88 : vector<2x8x8xf32> to vector<16x8xf32>
    %90 = vector.extract_strided_slice %83 {offsets = [6, 0, 0], sizes = [2, 8, 8], strides = [1, 1, 1]} : vector<8x8x8xf32> to vector<2x8x8xf32>
    %91 = vector.shape_cast %90 : vector<2x8x8xf32> to vector<16x8xf32>
    %92 = tpu.concatenate %85, %87, %89, %91 in 1 : vector<16x8xf32>, vector<16x8xf32>, vector<16x8xf32>, vector<16x8xf32> -> vector<16x32xf32>
    %93 = vector.extract_strided_slice %8 {offsets = [3, 0], sizes = [1, 32], strides = [1, 1]} : vector<16x32xf32> to vector<1x32xf32>
    %94 = arith.truncf %92 : vector<16x32xf32> to vector<16x32xbf16>
    %cst_40 = arith.constant dense<0.000000e+00> : vector<16x32xf32>
    %95 = tpu.matmul %94, %14, %cst_40 {dimension_numbers = #tpu.dot_dimension_numbers<[1], [0], [0], [1], [0, 0, 1, 1], [], []>} : vector<16x32xbf16>, vector<32x32xbf16>, vector<16x32xf32> -> vector<16x32xf32>
    %96 = vector.broadcast %93 : vector<1x32xf32> to vector<16x32xf32>
    %97 = arith.addf %95, %96 : vector<16x32xf32>
    %98 = arith.addf %4, %97 : vector<16x32xf32>
    %99 = vector.extract_strided_slice %8 {offsets = [9, 0], sizes = [1, 32], strides = [1, 1]} : vector<16x32xf32> to vector<1x32xf32>
    %100 = vector.extract_strided_slice %8 {offsets = [10, 0], sizes = [1, 32], strides = [1, 1]} : vector<16x32xf32> to vector<1x32xf32>
    %cst_41 = arith.constant dense<0.000000e+00> : vector<16xf32>
    %101 = vector.multi_reduction <add>, %98, %cst_41 [1] : vector<16x32xf32> to vector<16xf32>
    %102 = vector.shape_cast %101 : vector<16xf32> to vector<16x1xf32>
    %cst_42 = arith.constant 3.200000e+01 : f32
    %103 = vector.broadcast %cst_42 : f32 to vector<16x1xf32>
    %104 = arith.divf %102, %103 : vector<16x1xf32>
    %105 = vector.broadcast %104 : vector<16x1xf32> to vector<16x32xf32>
    %106 = arith.subf %98, %105 : vector<16x32xf32>
    %107 = arith.mulf %106, %106 : vector<16x32xf32>
    %cst_43 = arith.constant dense<0.000000e+00> : vector<16xf32>
    %108 = vector.multi_reduction <add>, %107, %cst_43 [1] : vector<16x32xf32> to vector<16xf32>
    %109 = vector.shape_cast %108 : vector<16xf32> to vector<16x1xf32>
    %cst_44 = arith.constant 3.200000e+01 : f32
    %110 = vector.broadcast %cst_44 : f32 to vector<16x1xf32>
    %111 = arith.divf %109, %110 : vector<16x1xf32>
    %112 = vector.broadcast %104 : vector<16x1xf32> to vector<16x32xf32>
    %113 = arith.subf %98, %112 : vector<16x32xf32>
    %cst_45 = arith.constant 9.99999974E-6 : f32
    %114 = vector.broadcast %cst_45 : f32 to vector<16x1xf32>
    %115 = arith.addf %111, %114 : vector<16x1xf32>
    %116 = math.rsqrt %115 : vector<16x1xf32>
    %117 = vector.broadcast %116 : vector<16x1xf32> to vector<16x32xf32>
    %118 = arith.mulf %113, %117 : vector<16x32xf32>
    %119 = vector.broadcast %99 : vector<1x32xf32> to vector<16x32xf32>
    %120 = arith.mulf %118, %119 : vector<16x32xf32>
    %121 = vector.broadcast %100 : vector<1x32xf32> to vector<16x32xf32>
    %122 = arith.addf %120, %121 : vector<16x32xf32>
    %123 = vector.extract_strided_slice %8 {offsets = [4, 0], sizes = [1, 32], strides = [1, 1]} : vector<16x32xf32> to vector<1x32xf32>
    %124 = arith.truncf %122 : vector<16x32xf32> to vector<16x32xbf16>
    %cst_46 = arith.constant dense<0.000000e+00> : vector<16x32xf32>
    %125 = tpu.matmul %124, %16, %cst_46 {dimension_numbers = #tpu.dot_dimension_numbers<[1], [0], [0], [1], [0, 0, 1, 1], [], []>} : vector<16x32xbf16>, vector<32x32xbf16>, vector<16x32xf32> -> vector<16x32xf32>
    %126 = vector.broadcast %123 : vector<1x32xf32> to vector<16x32xf32>
    %127 = arith.addf %125, %126 : vector<16x32xf32>
    %cst_47 = arith.constant dense<0.000000e+00> : vector<32x64xf32>
    %128 = tpu.matmul %6, %18, %cst_47 {dimension_numbers = #tpu.dot_dimension_numbers<[1], [0], [0], [1], [0, 0, 1, 1], [], []>} : vector<32x32xbf16>, vector<32x64xbf16>, vector<32x64xf32> -> vector<32x64xf32>
    %129 = vector.extract_strided_slice %128 {offsets = [0, 0], sizes = [32, 32], strides = [1, 1]} : vector<32x64xf32> to vector<32x32xf32>
    %130 = vector.extract_strided_slice %8 {offsets = [5, 0], sizes = [1, 32], strides = [1, 1]} : vector<16x32xf32> to vector<1x32xf32>
    %131 = vector.broadcast %130 : vector<1x32xf32> to vector<32x32xf32>
    %132 = arith.addf %129, %131 : vector<32x32xf32>
    %133 = vector.extract_strided_slice %128 {offsets = [0, 32], sizes = [32, 32], strides = [1, 1]} : vector<32x64xf32> to vector<32x32xf32>
    %134 = vector.extract_strided_slice %8 {offsets = [6, 0], sizes = [1, 32], strides = [1, 1]} : vector<16x32xf32> to vector<1x32xf32>
    %135 = vector.broadcast %134 : vector<1x32xf32> to vector<32x32xf32>
    %136 = arith.addf %133, %135 : vector<32x32xf32>
    %cst_48 = arith.constant 0.353553385 : f32
    %137 = vector.broadcast %cst_48 : f32 to vector<16x32xf32>
    %138 = arith.mulf %127, %137 : vector<16x32xf32>
    %139 = vector.shape_cast %138 : vector<16x32xf32> to vector<2x8x32xf32>
    %140 = arith.truncf %139 : vector<2x8x32xf32> to vector<2x8x32xbf16>
    %141 = vector.shape_cast %132 : vector<32x32xf32> to vector<2x16x32xf32>
    %142 = arith.truncf %141 : vector<2x16x32xf32> to vector<2x16x32xbf16>
    %143 = vector.shape_cast %136 : vector<32x32xf32> to vector<2x16x32xf32>
    %144 = arith.truncf %143 : vector<2x16x32xf32> to vector<2x16x32xbf16>
    %145 = vector.extract_strided_slice %140 {offsets = [0, 0, 0], sizes = [2, 8, 8], strides = [1, 1, 1]} : vector<2x8x32xbf16> to vector<2x8x8xbf16>
    %146 = vector.extract_strided_slice %140 {offsets = [0, 0, 8], sizes = [2, 8, 8], strides = [1, 1, 1]} : vector<2x8x32xbf16> to vector<2x8x8xbf16>
    %147 = vector.extract_strided_slice %140 {offsets = [0, 0, 16], sizes = [2, 8, 8], strides = [1, 1, 1]} : vector<2x8x32xbf16> to vector<2x8x8xbf16>
    %148 = vector.extract_strided_slice %140 {offsets = [0, 0, 24], sizes = [2, 8, 8], strides = [1, 1, 1]} : vector<2x8x32xbf16> to vector<2x8x8xbf16>
    %149 = tpu.concatenate %145, %146, %147, %148 in 0 : vector<2x8x8xbf16>, vector<2x8x8xbf16>, vector<2x8x8xbf16>, vector<2x8x8xbf16> -> vector<8x8x8xbf16>
    %150 = vector.extract_strided_slice %142 {offsets = [0, 0, 0], sizes = [2, 16, 8], strides = [1, 1, 1]} : vector<2x16x32xbf16> to vector<2x16x8xbf16>
    %151 = vector.extract_strided_slice %142 {offsets = [0, 0, 8], sizes = [2, 16, 8], strides = [1, 1, 1]} : vector<2x16x32xbf16> to vector<2x16x8xbf16>
    %152 = vector.extract_strided_slice %142 {offsets = [0, 0, 16], sizes = [2, 16, 8], strides = [1, 1, 1]} : vector<2x16x32xbf16> to vector<2x16x8xbf16>
    %153 = vector.extract_strided_slice %142 {offsets = [0, 0, 24], sizes = [2, 16, 8], strides = [1, 1, 1]} : vector<2x16x32xbf16> to vector<2x16x8xbf16>
    %154 = tpu.concatenate %150, %151, %152, %153 in 0 : vector<2x16x8xbf16>, vector<2x16x8xbf16>, vector<2x16x8xbf16>, vector<2x16x8xbf16> -> vector<8x16x8xbf16>
    %155 = vector.extract_strided_slice %144 {offsets = [0, 0, 0], sizes = [2, 16, 8], strides = [1, 1, 1]} : vector<2x16x32xbf16> to vector<2x16x8xbf16>
    %156 = vector.extract_strided_slice %144 {offsets = [0, 0, 8], sizes = [2, 16, 8], strides = [1, 1, 1]} : vector<2x16x32xbf16> to vector<2x16x8xbf16>
    %157 = vector.extract_strided_slice %144 {offsets = [0, 0, 16], sizes = [2, 16, 8], strides = [1, 1, 1]} : vector<2x16x32xbf16> to vector<2x16x8xbf16>
    %158 = vector.extract_strided_slice %144 {offsets = [0, 0, 24], sizes = [2, 16, 8], strides = [1, 1, 1]} : vector<2x16x32xbf16> to vector<2x16x8xbf16>
    %159 = tpu.concatenate %155, %156, %157, %158 in 0 : vector<2x16x8xbf16>, vector<2x16x8xbf16>, vector<2x16x8xbf16>, vector<2x16x8xbf16> -> vector<8x16x8xbf16>
    "tpu.trace_start"() <{level = 10 : i32, message = "gtd,gsd->gts"}> : () -> ()
    %cst_49 = arith.constant dense<0.000000e+00> : vector<8x8x16xf32>
    %160 = tpu.matmul %149, %154, %cst_49 {dimension_numbers = #tpu.dot_dimension_numbers<[2], [2], [1], [1], [0, 0, 0, 1, 1, 1], [0], [0]>} : vector<8x8x8xbf16>, vector<8x16x8xbf16>, vector<8x8x16xf32> -> vector<8x8x16xf32>
    "tpu.trace_stop"() : () -> ()
    %cst_50 = arith.constant dense<0xFF800000> : vector<8x8xf32>
    %161 = vector.multi_reduction <maximumf>, %160, %cst_50 [2] : vector<8x8x16xf32> to vector<8x8xf32>
    %162 = vector.shape_cast %161 : vector<8x8xf32> to vector<8x8x1xf32>
    %163 = vector.broadcast %162 : vector<8x8x1xf32> to vector<8x8x16xf32>
    %164 = arith.subf %160, %163 : vector<8x8x16xf32>
    %165 = math.exp %164 : vector<8x8x16xf32>
    %cst_51 = arith.constant dense<0.000000e+00> : vector<8x8xf32>
    %166 = vector.multi_reduction <add>, %165, %cst_51 [2] : vector<8x8x16xf32> to vector<8x8xf32>
    %167 = vector.shape_cast %166 : vector<8x8xf32> to vector<8x8x1xf32>
    %168 = tpu.reciprocal %167 {approx = true} : vector<8x8x1xf32> -> vector<8x8x1xf32>
    %169 = vector.broadcast %168 : vector<8x8x1xf32> to vector<8x8x16xf32>
    %170 = arith.mulf %165, %169 : vector<8x8x16xf32>
    %171 = arith.truncf %170 : vector<8x8x16xf32> to vector<8x8x16xbf16>
    "tpu.trace_start"() <{level = 10 : i32, message = "gts,gsd->gtd"}> : () -> ()
    %cst_52 = arith.constant dense<0.000000e+00> : vector<8x8x8xf32>
    %172 = tpu.matmul %171, %159, %cst_52 {dimension_numbers = #tpu.dot_dimension_numbers<[2], [1], [1], [2], [0, 0, 0, 1, 1, 2], [0], [0]>} : vector<8x8x16xbf16>, vector<8x16x8xbf16>, vector<8x8x8xf32> -> vector<8x8x8xf32>
    "tpu.trace_stop"() : () -> ()
    %173 = vector.extract_strided_slice %172 {offsets = [0, 0, 0], sizes = [2, 8, 8], strides = [1, 1, 1]} : vector<8x8x8xf32> to vector<2x8x8xf32>
    %174 = vector.shape_cast %173 : vector<2x8x8xf32> to vector<16x8xf32>
    %175 = vector.extract_strided_slice %172 {offsets = [2, 0, 0], sizes = [2, 8, 8], strides = [1, 1, 1]} : vector<8x8x8xf32> to vector<2x8x8xf32>
    %176 = vector.shape_cast %175 : vector<2x8x8xf32> to vector<16x8xf32>
    %177 = vector.extract_strided_slice %172 {offsets = [4, 0, 0], sizes = [2, 8, 8], strides = [1, 1, 1]} : vector<8x8x8xf32> to vector<2x8x8xf32>
    %178 = vector.shape_cast %177 : vector<2x8x8xf32> to vector<16x8xf32>
    %179 = vector.extract_strided_slice %172 {offsets = [6, 0, 0], sizes = [2, 8, 8], strides = [1, 1, 1]} : vector<8x8x8xf32> to vector<2x8x8xf32>
    %180 = vector.shape_cast %179 : vector<2x8x8xf32> to vector<16x8xf32>
    %181 = tpu.concatenate %174, %176, %178, %180 in 1 : vector<16x8xf32>, vector<16x8xf32>, vector<16x8xf32>, vector<16x8xf32> -> vector<16x32xf32>
    %182 = vector.extract_strided_slice %8 {offsets = [7, 0], sizes = [1, 32], strides = [1, 1]} : vector<16x32xf32> to vector<1x32xf32>
    %183 = arith.truncf %181 : vector<16x32xf32> to vector<16x32xbf16>
    %cst_53 = arith.constant dense<0.000000e+00> : vector<16x32xf32>
    %184 = tpu.matmul %183, %20, %cst_53 {dimension_numbers = #tpu.dot_dimension_numbers<[1], [0], [0], [1], [0, 0, 1, 1], [], []>} : vector<16x32xbf16>, vector<32x32xbf16>, vector<16x32xf32> -> vector<16x32xf32>
    %185 = vector.broadcast %182 : vector<1x32xf32> to vector<16x32xf32>
    %186 = arith.addf %184, %185 : vector<16x32xf32>
    %187 = arith.addf %122, %186 : vector<16x32xf32>
    %188 = vector.extract_strided_slice %8 {offsets = [11, 0], sizes = [1, 32], strides = [1, 1]} : vector<16x32xf32> to vector<1x32xf32>
    %189 = vector.extract_strided_slice %8 {offsets = [12, 0], sizes = [1, 32], strides = [1, 1]} : vector<16x32xf32> to vector<1x32xf32>
    %cst_54 = arith.constant dense<0.000000e+00> : vector<16xf32>
    %190 = vector.multi_reduction <add>, %187, %cst_54 [1] : vector<16x32xf32> to vector<16xf32>
    %191 = vector.shape_cast %190 : vector<16xf32> to vector<16x1xf32>
    %cst_55 = arith.constant 3.200000e+01 : f32
    %192 = vector.broadcast %cst_55 : f32 to vector<16x1xf32>
    %193 = arith.divf %191, %192 : vector<16x1xf32>
    %194 = vector.broadcast %193 : vector<16x1xf32> to vector<16x32xf32>
    %195 = arith.subf %187, %194 : vector<16x32xf32>
    %196 = arith.mulf %195, %195 : vector<16x32xf32>
    %cst_56 = arith.constant dense<0.000000e+00> : vector<16xf32>
    %197 = vector.multi_reduction <add>, %196, %cst_56 [1] : vector<16x32xf32> to vector<16xf32>
    %198 = vector.shape_cast %197 : vector<16xf32> to vector<16x1xf32>
    %cst_57 = arith.constant 3.200000e+01 : f32
    %199 = vector.broadcast %cst_57 : f32 to vector<16x1xf32>
    %200 = arith.divf %198, %199 : vector<16x1xf32>
    %201 = vector.broadcast %193 : vector<16x1xf32> to vector<16x32xf32>
    %202 = arith.subf %187, %201 : vector<16x32xf32>
    %cst_58 = arith.constant 9.99999974E-6 : f32
    %203 = vector.broadcast %cst_58 : f32 to vector<16x1xf32>
    %204 = arith.addf %200, %203 : vector<16x1xf32>
    %205 = math.rsqrt %204 : vector<16x1xf32>
    %206 = vector.broadcast %205 : vector<16x1xf32> to vector<16x32xf32>
    %207 = arith.mulf %202, %206 : vector<16x32xf32>
    %208 = vector.broadcast %188 : vector<1x32xf32> to vector<16x32xf32>
    %209 = arith.mulf %207, %208 : vector<16x32xf32>
    %210 = vector.broadcast %189 : vector<1x32xf32> to vector<16x32xf32>
    %211 = arith.addf %209, %210 : vector<16x32xf32>
    %212 = arith.truncf %211 : vector<16x32xf32> to vector<16x32xbf16>
    %cst_59 = arith.constant dense<0.000000e+00> : vector<16x64xf32>
    %213 = tpu.matmul %212, %22, %cst_59 {dimension_numbers = #tpu.dot_dimension_numbers<[1], [0], [0], [1], [0, 0, 1, 1], [], []>} : vector<16x32xbf16>, vector<32x64xbf16>, vector<16x64xf32> -> vector<16x64xf32>
    %214 = vector.broadcast %10 : vector<1x64xf32> to vector<16x64xf32>
    %215 = arith.addf %213, %214 : vector<16x64xf32>
    %cst_60 = arith.constant 0.000000e+00 : f32
    %216 = vector.broadcast %cst_60 : f32 to vector<16x64xf32>
    %217 = arith.maximumf %215, %216 : vector<16x64xf32>
    %218 = vector.extract_strided_slice %8 {offsets = [8, 0], sizes = [1, 32], strides = [1, 1]} : vector<16x32xf32> to vector<1x32xf32>
    %219 = arith.truncf %217 : vector<16x64xf32> to vector<16x64xbf16>
    %cst_61 = arith.constant dense<0.000000e+00> : vector<16x32xf32>
    %220 = tpu.matmul %219, %24, %cst_61 {dimension_numbers = #tpu.dot_dimension_numbers<[1], [0], [0], [1], [0, 0, 1, 1], [], []>} : vector<16x64xbf16>, vector<64x32xbf16>, vector<16x32xf32> -> vector<16x32xf32>
    %221 = vector.broadcast %218 : vector<1x32xf32> to vector<16x32xf32>
    %222 = arith.addf %220, %221 : vector<16x32xf32>
    %223 = arith.addf %211, %222 : vector<16x32xf32>
    %224 = vector.extract_strided_slice %8 {offsets = [13, 0], sizes = [1, 32], strides = [1, 1]} : vector<16x32xf32> to vector<1x32xf32>
    %225 = vector.extract_strided_slice %8 {offsets = [14, 0], sizes = [1, 32], strides = [1, 1]} : vector<16x32xf32> to vector<1x32xf32>
    %cst_62 = arith.constant dense<0.000000e+00> : vector<16xf32>
    %226 = vector.multi_reduction <add>, %223, %cst_62 [1] : vector<16x32xf32> to vector<16xf32>
    %227 = vector.shape_cast %226 : vector<16xf32> to vector<16x1xf32>
    %cst_63 = arith.constant 3.200000e+01 : f32
    %228 = vector.broadcast %cst_63 : f32 to vector<16x1xf32>
    %229 = arith.divf %227, %228 : vector<16x1xf32>
    %230 = vector.broadcast %229 : vector<16x1xf32> to vector<16x32xf32>
    %231 = arith.subf %223, %230 : vector<16x32xf32>
    %232 = arith.mulf %231, %231 : vector<16x32xf32>
    %cst_64 = arith.constant dense<0.000000e+00> : vector<16xf32>
    %233 = vector.multi_reduction <add>, %232, %cst_64 [1] : vector<16x32xf32> to vector<16xf32>
    %234 = vector.shape_cast %233 : vector<16xf32> to vector<16x1xf32>
    %cst_65 = arith.constant 3.200000e+01 : f32
    %235 = vector.broadcast %cst_65 : f32 to vector<16x1xf32>
    %236 = arith.divf %234, %235 : vector<16x1xf32>
    %237 = vector.broadcast %229 : vector<16x1xf32> to vector<16x32xf32>
    %238 = arith.subf %223, %237 : vector<16x32xf32>
    %cst_66 = arith.constant 9.99999974E-6 : f32
    %239 = vector.broadcast %cst_66 : f32 to vector<16x1xf32>
    %240 = arith.addf %236, %239 : vector<16x1xf32>
    %241 = math.rsqrt %240 : vector<16x1xf32>
    %242 = vector.broadcast %241 : vector<16x1xf32> to vector<16x32xf32>
    %243 = arith.mulf %238, %242 : vector<16x32xf32>
    %244 = vector.broadcast %224 : vector<1x32xf32> to vector<16x32xf32>
    %245 = arith.mulf %243, %244 : vector<16x32xf32>
    %246 = vector.broadcast %225 : vector<1x32xf32> to vector<16x32xf32>
    %247 = arith.addf %245, %246 : vector<16x32xf32>
    %248 = vector.shape_cast %247 : vector<16x32xf32> to vector<2x8x32xf32>
    %c1_i32 = arith.constant 1 : i32
    %249 = arith.cmpi slt, %arg1, %c1_i32 : i32
    %250 = arith.extui %249 : i1 to i32
    %c0_i32_67 = arith.constant 0 : i32
    %251 = arith.cmpi ne, %250, %c0_i32_67 : i32
    scf.if %251 {
      %c0_70 = arith.constant 0 : index
      %c0_71 = arith.constant 0 : index
      %c0_72 = arith.constant 0 : index
      %255 = vector.load %arg14[%c0_70, %c0_71, %c0_72] : memref<2x8x32xf32, #tpu.memory_space<vmem>>, vector<2x8x32xf32>
      tpu.vector_store %arg14[%c0_70, %c0_71, %c0_72], %248 {strides = array<i32>} : memref<2x8x32xf32, #tpu.memory_space<vmem>>, vector<2x8x32xf32>,
    } else {
    }
    %c1_i32_68 = arith.constant 1 : i32
    %252 = arith.cmpi eq, %arg1, %c1_i32_68 : i32
    %253 = arith.extui %252 : i1 to i32
    %c0_i32_69 = arith.constant 0 : i32
    %254 = arith.cmpi ne, %253, %c0_i32_69 : i32
    scf.if %254 {
      %c0_70 = arith.constant 0 : index
      %c0_71 = arith.constant 0 : index
      %c0_72 = arith.constant 0 : index
      %255 = vector.load %arg13[%c0_70, %c0_71, %c0_72] : memref<2x8x32xf32, #tpu.memory_space<vmem>>, vector<2x8x32xf32>
      tpu.vector_store %arg13[%c0_70, %c0_71, %c0_72], %248 {strides = array<i32>} : memref<2x8x32xf32, #tpu.memory_space<vmem>>, vector<2x8x32xf32>,
    } else {
    }
    return
  }
  func.func @transform_0(%arg0: i32, %arg1: i32) -> (i32, i32, i32) {
    %c0_i32 = arith.constant 0 : i32
    %c0_i32_0 = arith.constant 0 : i32
    %c0_i32_1 = arith.constant 0 : i32
    return %arg0, %c0_i32, %c0_i32_0 : i32, i32, i32
  }
  func.func @transform_1(%arg0: i32, %arg1: i32) -> (i32, i32, i32) {
    %c0_i32 = arith.constant 0 : i32
    %c0_i32_0 = arith.constant 0 : i32
    %c0_i32_1 = arith.constant 0 : i32
    return %arg0, %c0_i32, %c0_i32_0 : i32, i32, i32
  }
  func.func @transform_2(%arg0: i32, %arg1: i32) -> (i32, i32, i32) {
    %c0_i32 = arith.constant 0 : i32
    %c0_i32_0 = arith.constant 0 : i32
    %c0_i32_1 = arith.constant 0 : i32
    return %arg1, %c0_i32, %c0_i32_0 : i32, i32, i32
  }
  func.func @transform_3(%arg0: i32, %arg1: i32) -> (i32, i32, i32) {
    %c0_i32 = arith.constant 0 : i32
    %c0_i32_0 = arith.constant 0 : i32
    %c0_i32_1 = arith.constant 0 : i32
    return %arg1, %c0_i32, %c0_i32_0 : i32, i32, i32
  }
  func.func @transform_4(%arg0: i32, %arg1: i32) -> (i32, i32, i32) {
    %c0_i32 = arith.constant 0 : i32
    %c0_i32_0 = arith.constant 0 : i32
    %c0_i32_1 = arith.constant 0 : i32
    return %arg1, %c0_i32, %c0_i32_0 : i32, i32, i32
  }
  func.func @transform_5(%arg0: i32, %arg1: i32) -> (i32, i32, i32) {
    %c0_i32 = arith.constant 0 : i32
    %c0_i32_0 = arith.constant 0 : i32
    %c0_i32_1 = arith.constant 0 : i32
    return %arg1, %c0_i32, %c0_i32_0 : i32, i32, i32
  }
  func.func @transform_6(%arg0: i32, %arg1: i32) -> (i32, i32, i32) {
    %c0_i32 = arith.constant 0 : i32
    %c0_i32_0 = arith.constant 0 : i32
    %c0_i32_1 = arith.constant 0 : i32
    return %arg1, %c0_i32, %c0_i32_0 : i32, i32, i32
  }
  func.func @transform_7(%arg0: i32, %arg1: i32) -> (i32, i32, i32) {
    %c0_i32 = arith.constant 0 : i32
    %c0_i32_0 = arith.constant 0 : i32
    %c0_i32_1 = arith.constant 0 : i32
    return %arg1, %c0_i32, %c0_i32_0 : i32, i32, i32
  }
  func.func @transform_8(%arg0: i32, %arg1: i32) -> (i32, i32, i32) {
    %c0_i32 = arith.constant 0 : i32
    %c0_i32_0 = arith.constant 0 : i32
    %c0_i32_1 = arith.constant 0 : i32
    return %arg1, %c0_i32, %c0_i32_0 : i32, i32, i32
  }
  func.func @transform_9(%arg0: i32, %arg1: i32) -> (i32, i32, i32) {
    %c0_i32 = arith.constant 0 : i32
    %c0_i32_0 = arith.constant 0 : i32
    %c0_i32_1 = arith.constant 0 : i32
    return %arg1, %c0_i32, %c0_i32_0 : i32, i32, i32
  }
  func.func @transform_10(%arg0: i32, %arg1: i32) -> (i32, i32, i32) {
    %c0_i32 = arith.constant 0 : i32
    %c0_i32_0 = arith.constant 0 : i32
    %c0_i32_1 = arith.constant 0 : i32
    return %arg1, %c0_i32, %c0_i32_0 : i32, i32, i32
  }
  func.func @transform_11(%arg0: i32, %arg1: i32) -> (i32, i32, i32) {
    %c0_i32 = arith.constant 0 : i32
    %c0_i32_0 = arith.constant 0 : i32
    %c0_i32_1 = arith.constant 0 : i32
    return %arg0, %c0_i32, %c0_i32_0 : i32, i32, i32
  }
}

</mosaic_0001>

<llo_original>
// kernel: tpu_custom_call.1
$region0: #{tpu_custom_call.1}
  #allocation0 [shape = 'u32[]', space=smem, size = 0x4, offset = 0x4, fixed_abs, tag = 'smem constant byte address 0x4 - core index']
  #allocation1 [shape = 'u32[72,128]{1,0:T(1,128)}', space=vmem, size = 0x9000, scoped, tag = 'internal scratch']
  #allocation2 [shape = 'f32[2,8,32]{2,1,0:T(8,128)}', space=vmem, size = 0x2000, scoped, tag = 'scratch operand']
  %s0 = inlined_call_operand.hbm [shape: f32[2,8,32], index: 0, kind: input, shape index: {}]
  %s1 = inlined_call_operand.hbm [shape: bf16[2,16,32], index: 1, kind: input, shape index: {}]
  %s2 = inlined_call_operand.vmem [shape: bf16[2,32,96], index: 2, kind: input, shape index: {}]
  %s3 = inlined_call_operand.vmem [shape: bf16[2,32,32], index: 3, kind: input, shape index: {}]
  %s4 = inlined_call_operand.vmem [shape: bf16[2,32,32], index: 4, kind: input, shape index: {}]
  %s5 = inlined_call_operand.hbm [shape: bf16[2,32,64], index: 5, kind: input, shape index: {}]
  %s6 = inlined_call_operand.hbm [shape: bf16[2,32,32], index: 6, kind: input, shape index: {}]
  %s7 = inlined_call_operand.hbm [shape: bf16[2,32,64], index: 7, kind: input, shape index: {}]
  %s8 = inlined_call_operand.vmem [shape: bf16[2,64,32], index: 8, kind: input, shape index: {}]
  %s9 = inlined_call_operand.hbm [shape: f32[2,16,32], index: 9, kind: input, shape index: {}]
  %s10 = inlined_call_operand.vmem [shape: f32[2,1,64], index: 10, kind: input, shape index: {}]
  %s11 = inlined_call_operand.hbm [shape: f32[2,8,32], index: 11, kind: output, shape index: {}]
  %s12 = sld [smem:[#allocation0]]
  $region113: #{tpu_custom_call.1} parent=0
    _
  %s14 = ssub.s32 1, %s12
  %s15 = scalar_select 0, %s14, %s12
  $region1: #{tpu_custom_call.1} parent=0
    #allocation3 [shape = 'u8[8192]{0}', space=vmem, size = 0x2000, scoped, tag = 'input window, operand 0, single buffered']
    #allocation4 [shape = 's32[2]{0}', space=sflag, size = 0x8, scoped, tag = 'scoped memory for tpu_custom_call.1']
    #allocation5 [shape = 's32[2]{0}', space=sflag, size = 0x8, scoped, tag = 'scoped memory for tpu_custom_call.1']
    #allocation6 [shape = 'u8[8192]{0}', space=vmem, size = 0x2000, scoped, tag = 'input window, operand 1, single buffered']
    #allocation7 [shape = 's32[1]{0}', space=sflag, size = 0x4, scoped, tag = 'scoped memory for tpu_custom_call.1']
    #allocation8 [shape = 'u8[16384]{0}', space=vmem, size = 0x4000, scoped, tag = 'input window, operand 5']
    #allocation9 [shape = 'u8[16384]{0}', space=vmem, size = 0x4000, scoped, tag = 'input window, operand 6']
    #allocation10 [shape = 'u8[16384]{0}', space=vmem, size = 0x4000, scoped, tag = 'input window, operand 7']
    #allocation11 [shape = 'u8[16384]{0}', space=vmem, size = 0x4000, scoped, tag = 'input window, operand 9']
    #allocation12 [shape = 'u8[8192]{0}', space=vmem, size = 0x2000, scoped, tag = 'output window, operand 0, single buffered']
    %16 = vsyncpa [#allocation4], 0
    %17 = vsyncpa [#allocation7], 0
    %18 = vsyncpa [#allocation5], 0
    loop: start=0, step=1, limit=4
    $region2: #{tpu_custom_call.1} parent=1 // loop_pre_header
      _
    $region3: #{tpu_custom_call.1} parent=1 // loop_header
      %s20 = sphi 0, %s24
      %p21 = scmp.ge.s32.totalorder %s20, 4
      %s27 = sphi 0, %s39
      %s28 = sphi 0, %s35
      %s29 = sphi 0, %s27
      %s30 = sphi 0, %s28
      %s31 = sphi 0, %s29
      %s32 = sphi 0, %s30
      %s42 = sphi 0, %s44
      %s45 = sphi 0, %s42
      %s46 = sphi 0, %s45
      %s62 = sphi 0, %s46
      %s68 = sphi 0, %s70
      %s71 = sphi 0, %s68
      %s72 = sphi 0, %s71
      %s88 = sphi 0, %s72
      %s94 = sphi 0, %s96
      %s97 = sphi 0, %s94
      %s98 = sphi 0, %s97
      %s114 = sphi 0, %s98
      %s120 = sphi 0, %s122
      %s123 = sphi 0, %s120
      %s124 = sphi 0, %s123
      %s140 = sphi 0, %s124
      %s146 = sphi 0, %s148
      %s149 = sphi 0, %s146
      %s150 = sphi 0, %s149
      %s166 = sphi 0, %s150
      %s172 = sphi 0, %s174
      %s175 = sphi 0, %s172
      %s176 = sphi 0, %s175
      %s192 = sphi 0, %s176
      %s198 = sphi 0, %s200
      %s201 = sphi 0, %s198
      %s202 = sphi 0, %s201
      %s218 = sphi 0, %s202
      %s224 = sphi 0, %s226
      %s227 = sphi 0, %s224
      %s228 = sphi 0, %s227
      %s244 = sphi 0, %s228
      %s250 = sphi 0, %s252
      %s253 = sphi 0, %s250
      %s254 = sphi 0, %s253
      %s270 = sphi 0, %s254
      %s276 = sphi 0, %s278
      %s279 = sphi 0, %s276
      %s280 = sphi 0, %s279
      %s296 = sphi 0, %s280
      %s302 = sphi 0, %s304
      %s305 = sphi 0, %s302
      %s306 = sphi 0, %s305
      %s322 = sphi 0, %s306
      %s328 = sphi 0, %s330
      %s331 = sphi 0, %s328
      %s332 = sphi 0, %s331
      %s348 = sphi 0, %s332
    $region4: #{tpu_custom_call.1} parent=1 // loop_header_branch
      %23 = sbr.rel (%p21) target = $region8
    $region5: #{tpu_custom_call.1} parent=1 // loop_body
      %s25 = ssub.s32 %s20, 1
      %s26 = ssub.s32 %s20, 2
      %s33 = sadd.s32 1, %s28
      %p34 = scmp.ge.s32.totalorder %s33, 2
      %s35 = scalar_select %p34, 0, %s33
      %s36 = sadd.s32 1, %s27
      %s37 = scalar_select %p34, %s36, %s27
      %p38 = scmp.ge.s32.totalorder %s37, 1
      %s39 = scalar_select %p38, 0, %s37
      %s40 = ssub.s32 %s27, %s39
      %p41 = scmp.eq.s32.totalorder %s40, 0
      %s43 = sadd.s32 %s42, 1
      %s44 = scalar_select %p41, %s42, %s43
      %p47 = pneg %p41
      %p48 = scmp.eq.s32.totalorder %s20, 1
      %p49 = por %p47, %p48
      %p50 = scmp.ne.s32.totalorder %s42, %s45
      %p51 = scmp.eq.s32.totalorder %s20, 0
      %p52 = por %p50, %p51
      %p53 = scmp.ne.s32.totalorder %s42, %s45
      %p54 = scmp.eq.s32.totalorder %s25, 1
      %p55 = por %p53, %p54
      %p56 = scmp.ne.s32.totalorder %s45, %s46
      %p57 = scmp.eq.s32.totalorder %s25, 0
      %p58 = por %p56, %p57
      %p59 = scmp.ne.s32.totalorder %s45, %s46
      %p60 = scmp.eq.s32.totalorder %s26, 1
      %p61 = por %p59, %p60
      %p63 = scmp.ne.s32.totalorder %s46, %s62
      %p64 = scmp.eq.s32.totalorder %s26, 0
      %p65 = por %p63, %p64
      %s66 = ssub.s32 %s27, %s39
      %p67 = scmp.eq.s32.totalorder %s66, 0
      %s69 = sadd.s32 %s68, 1
      %s70 = scalar_select %p67, %s68, %s69
      %p73 = pneg %p67
      %p74 = scmp.eq.s32.totalorder %s20, 1
      %p75 = por %p73, %p74
      %p76 = scmp.ne.s32.totalorder %s68, %s71
      %p77 = scmp.eq.s32.totalorder %s20, 0
      %p78 = por %p76, %p77
      %p79 = scmp.ne.s32.totalorder %s68, %s71
      %p80 = scmp.eq.s32.totalorder %s25, 1
      %p81 = por %p79, %p80
      %p82 = scmp.ne.s32.totalorder %s71, %s72
      %p83 = scmp.eq.s32.totalorder %s25, 0
      %p84 = por %p82, %p83
      %p85 = scmp.ne.s32.totalorder %s71, %s72
      %p86 = scmp.eq.s32.totalorder %s26, 1
      %p87 = por %p85, %p86
      %p89 = scmp.ne.s32.totalorder %s72, %s88
      %p90 = scmp.eq.s32.totalorder %s26, 0
      %p91 = por %p89, %p90
      %s92 = ssub.s32 %s28, %s35
      %p93 = scmp.eq.s32.totalorder %s92, 0
      %s95 = sadd.s32 %s94, 1
      %s96 = scalar_select %p93, %s94, %s95
      %p99 = pneg %p93
      %p100 = scmp.eq.s32.totalorder %s20, 1
      %p101 = por %p99, %p100
      %p102 = scmp.ne.s32.totalorder %s94, %s97
      %p103 = scmp.eq.s32.totalorder %s20, 0
      %p104 = por %p102, %p103
      %p105 = scmp.ne.s32.totalorder %s94, %s97
      %p106 = scmp.eq.s32.totalorder %s25, 1
      %p107 = por %p105, %p106
      %p108 = scmp.ne.s32.totalorder %s97, %s98
      %p109 = scmp.eq.s32.totalorder %s25, 0
      %p110 = por %p108, %p109
      %p111 = scmp.ne.s32.totalorder %s97, %s98
      %p112 = scmp.eq.s32.totalorder %s26, 1
      %p113 = por %p111, %p112
      %p115 = scmp.ne.s32.totalorder %s98, %s114
      %p116 = scmp.eq.s32.totalorder %s26, 0
      %p117 = por %p115, %p116
      %s118 = ssub.s32 %s28, %s35
      %p119 = scmp.eq.s32.totalorder %s118, 0
      %s121 = sadd.s32 %s120, 1
      %s122 = scalar_select %p119, %s120, %s121
      %p125 = pneg %p119
      %p126 = scmp.eq.s32.totalorder %s20, 1
      %p127 = por %p125, %p126
      %p128 = scmp.ne.s32.totalorder %s120, %s123
      %p129 = scmp.eq.s32.totalorder %s20, 0
      %p130 = por %p128, %p129
      %p131 = scmp.ne.s32.totalorder %s120, %s123
      %p132 = scmp.eq.s32.totalorder %s25, 1
      %p133 = por %p131, %p132
      %p134 = scmp.ne.s32.totalorder %s123, %s124
      %p135 = scmp.eq.s32.totalorder %s25, 0
      %p136 = por %p134, %p135
      %p137 = scmp.ne.s32.totalorder %s123, %s124
      %p138 = scmp.eq.s32.totalorder %s26, 1
      %p139 = por %p137, %p138
      %p141 = scmp.ne.s32.totalorder %s124, %s140
      %p142 = scmp.eq.s32.totalorder %s26, 0
      %p143 = por %p141, %p142
      %s144 = ssub.s32 %s28, %s35
      %p145 = scmp.eq.s32.totalorder %s144, 0
      %s147 = sadd.s32 %s146, 1
      %s148 = scalar_select %p145, %s146, %s147
      %p151 = pneg %p145
      %p152 = scmp.eq.s32.totalorder %s20, 1
      %p153 = por %p151, %p152
      %p154 = scmp.ne.s32.totalorder %s146, %s149
      %p155 = scmp.eq.s32.totalorder %s20, 0
      %p156 = por %p154, %p155
      %p157 = scmp.ne.s32.totalorder %s146, %s149
      %p158 = scmp.eq.s32.totalorder %s25, 1
      %p159 = por %p157, %p158
      %p160 = scmp.ne.s32.totalorder %s149, %s150
      %p161 = scmp.eq.s32.totalorder %s25, 0
      %p162 = por %p160, %p161
      %p163 = scmp.ne.s32.totalorder %s149, %s150
      %p164 = scmp.eq.s32.totalorder %s26, 1
      %p165 = por %p163, %p164
      %p167 = scmp.ne.s32.totalorder %s150, %s166
      %p168 = scmp.eq.s32.totalorder %s26, 0
      %p169 = por %p167, %p168
      %s170 = ssub.s32 %s28, %s35
      %p171 = scmp.eq.s32.totalorder %s170, 0
      %s173 = sadd.s32 %s172, 1
      %s174 = scalar_select %p171, %s172, %s173
      %p177 = pneg %p171
      %p178 = scmp.eq.s32.totalorder %s20, 1
      %p179 = por %p177, %p178
      %p180 = scmp.ne.s32.totalorder %s172, %s175
      %p181 = scmp.eq.s32.totalorder %s20, 0
      %p182 = por %p180, %p181
      %p183 = scmp.ne.s32.totalorder %s172, %s175
      %p184 = scmp.eq.s32.totalorder %s25, 1
      %p185 = por %p183, %p184
      %p186 = scmp.ne.s32.totalorder %s175, %s176
      %p187 = scmp.eq.s32.totalorder %s25, 0
      %p188 = por %p186, %p187
      %p189 = scmp.ne.s32.totalorder %s175, %s176
      %p190 = scmp.eq.s32.totalorder %s26, 1
      %p191 = por %p189, %p190
      %p193 = scmp.ne.s32.totalorder %s176, %s192
      %p194 = scmp.eq.s32.totalorder %s26, 0
      %p195 = por %p193, %p194
      %s196 = ssub.s32 %s28, %s35
      %p197 = scmp.eq.s32.totalorder %s196, 0
      %s199 = sadd.s32 %s198, 1
      %s200 = scalar_select %p197, %s198, %s199
      %p203 = pneg %p197
      %p204 = scmp.eq.s32.totalorder %s20, 1
      %p205 = por %p203, %p204
      %p206 = scmp.ne.s32.totalorder %s198, %s201
      %p207 = scmp.eq.s32.totalorder %s20, 0
      %p208 = por %p206, %p207
      %p209 = scmp.ne.s32.totalorder %s198, %s201
      %p210 = scmp.eq.s32.totalorder %s25, 1
      %p211 = por %p209, %p210
      %p212 = scmp.ne.s32.totalorder %s201, %s202
      %p213 = scmp.eq.s32.totalorder %s25, 0
      %p214 = por %p212, %p213
      %p215 = scmp.ne.s32.totalorder %s201, %s202
      %p216 = scmp.eq.s32.totalorder %s26, 1
      %p217 = por %p215, %p216
      %p219 = scmp.ne.s32.totalorder %s202, %s218
      %p220 = scmp.eq.s32.totalorder %s26, 0
      %p221 = por %p219, %p220
      %s222 = ssub.s32 %s28, %s35
      %p223 = scmp.eq.s32.totalorder %s222, 0
      %s225 = sadd.s32 %s224, 1
      %s226 = scalar_select %p223, %s224, %s225
      %p229 = pneg %p223
      %p230 = scmp.eq.s32.totalorder %s20, 1
      %p231 = por %p229, %p230
      %p232 = scmp.ne.s32.totalorder %s224, %s227
      %p233 = scmp.eq.s32.totalorder %s20, 0
      %p234 = por %p232, %p233
      %p235 = scmp.ne.s32.totalorder %s224, %s227
      %p236 = scmp.eq.s32.totalorder %s25, 1
      %p237 = por %p235, %p236
      %p238 = scmp.ne.s32.totalorder %s227, %s228
      %p239 = scmp.eq.s32.totalorder %s25, 0
      %p240 = por %p238, %p239
      %p241 = scmp.ne.s32.totalorder %s227, %s228
      %p242 = scmp.eq.s32.totalorder %s26, 1
      %p243 = por %p241, %p242
      %p245 = scmp.ne.s32.totalorder %s228, %s244
      %p246 = scmp.eq.s32.totalorder %s26, 0
      %p247 = por %p245, %p246
      %s248 = ssub.s32 %s28, %s35
      %p249 = scmp.eq.s32.totalorder %s248, 0
      %s251 = sadd.s32 %s250, 1
      %s252 = scalar_select %p249, %s250, %s251
      %p255 = pneg %p249
      %p256 = scmp.eq.s32.totalorder %s20, 1
      %p257 = por %p255, %p256
      %p258 = scmp.ne.s32.totalorder %s250, %s253
      %p259 = scmp.eq.s32.totalorder %s20, 0
      %p260 = por %p258, %p259
      %p261 = scmp.ne.s32.totalorder %s250, %s253
      %p262 = scmp.eq.s32.totalorder %s25, 1
      %p263 = por %p261, %p262
      %p264 = scmp.ne.s32.totalorder %s253, %s254
      %p265 = scmp.eq.s32.totalorder %s25, 0
      %p266 = por %p264, %p265
      %p267 = scmp.ne.s32.totalorder %s253, %s254
      %p268 = scmp.eq.s32.totalorder %s26, 1
      %p269 = por %p267, %p268
      %p271 = scmp.ne.s32.totalorder %s254, %s270
      %p272 = scmp.eq.s32.totalorder %s26, 0
      %p273 = por %p271, %p272
      %s274 = ssub.s32 %s28, %s35
      %p275 = scmp.eq.s32.totalorder %s274, 0
      %s277 = sadd.s32 %s276, 1
      %s278 = scalar_select %p275, %s276, %s277
      %p281 = pneg %p275
      %p282 = scmp.eq.s32.totalorder %s20, 1
      %p283 = por %p281, %p282
      %p284 = scmp.ne.s32.totalorder %s276, %s279
      %p285 = scmp.eq.s32.totalorder %s20, 0
      %p286 = por %p284, %p285
      %p287 = scmp.ne.s32.totalorder %s276, %s279
      %p288 = scmp.eq.s32.totalorder %s25, 1
      %p289 = por %p287, %p288
      %p290 = scmp.ne.s32.totalorder %s279, %s280
      %p291 = scmp.eq.s32.totalorder %s25, 0
      %p292 = por %p290, %p291
      %p293 = scmp.ne.s32.totalorder %s279, %s280
      %p294 = scmp.eq.s32.totalorder %s26, 1
      %p295 = por %p293, %p294
      %p297 = scmp.ne.s32.totalorder %s280, %s296
      %p298 = scmp.eq.s32.totalorder %s26, 0
      %p299 = por %p297, %p298
      %s300 = ssub.s32 %s28, %s35
      %p301 = scmp.eq.s32.totalorder %s300, 0
      %s303 = sadd.s32 %s302, 1
      %s304 = scalar_select %p301, %s302, %s303
      %p307 = pneg %p301
      %p308 = scmp.eq.s32.totalorder %s20, 1
      %p309 = por %p307, %p308
      %p310 = scmp.ne.s32.totalorder %s302, %s305
      %p311 = scmp.eq.s32.totalorder %s20, 0
      %p312 = por %p310, %p311
      %p313 = scmp.ne.s32.totalorder %s302, %s305
      %p314 = scmp.eq.s32.totalorder %s25, 1
      %p315 = por %p313, %p314
      %p316 = scmp.ne.s32.totalorder %s305, %s306
      %p317 = scmp.eq.s32.totalorder %s25, 0
      %p318 = por %p316, %p317
      %p319 = scmp.ne.s32.totalorder %s305, %s306
      %p320 = scmp.eq.s32.totalorder %s26, 1
      %p321 = por %p319, %p320
      %p323 = scmp.ne.s32.totalorder %s306, %s322
      %p324 = scmp.eq.s32.totalorder %s26, 0
      %p325 = por %p323, %p324
      %s326 = ssub.s32 %s27, %s39
      %p327 = scmp.eq.s32.totalorder %s326, 0
      %s329 = sadd.s32 %s328, 1
      %s330 = scalar_select %p327, %s328, %s329
      %p333 = pneg %p327
      %p334 = scmp.eq.s32.totalorder %s20, 1
      %p335 = por %p333, %p334
      %p336 = scmp.ne.s32.totalorder %s328, %s331
      %p337 = scmp.eq.s32.totalorder %s20, 0
      %p338 = por %p336, %p337
      %p339 = scmp.ne.s32.totalorder %s328, %s331
      %p340 = scmp.eq.s32.totalorder %s25, 1
      %p341 = por %p339, %p340
      %p342 = scmp.ne.s32.totalorder %s331, %s332
      %p343 = scmp.eq.s32.totalorder %s25, 0
      %p344 = por %p342, %p343
      %p345 = scmp.ne.s32.totalorder %s331, %s332
      %p346 = scmp.eq.s32.totalorder %s26, 1
      %p347 = por %p345, %p346
      %p349 = scmp.ne.s32.totalorder %s332, %s348
      %p350 = scmp.eq.s32.totalorder %s26, 0
      %p351 = por %p349, %p350
      %p352 = scmp.le.s32.totalorder 1, %s20
      %p353 = scmp.lt.s32.totalorder %s20, 3
      %p354 = pnand %p352, %p353
      %p355 = pneg %p354
      // Predicated region
      $region9: #{tpu_custom_call.1} parent=5 // pred_check
        _
      $region10: #{tpu_custom_call.1} parent=5 // pred_check_branch
        %357 = sbr.rel (%p354) target = $region12
      $region11: #{tpu_custom_call.1} parent=5 // pred_region
        %s358 = ssub.s32 %s20, 1
        // Predicated region
        $region13: #{tpu_custom_call.1} parent=11 // pred_check
          %p359 = pneg %p58
        $region14: #{tpu_custom_call.1} parent=11 // pred_check_branch
          %361 = sbr.rel (%p359) target = $region16
        $region15: #{tpu_custom_call.1} parent=11 // pred_region
          %s362 = smul.u32 2, %s29
          %364 = vsyncadd [#allocation4], 0
          %s365 = smul.addr %s362, 8
          %s366 = scalar_lea.hbm %s0, %s365
          %s367 = sshll.u32 %s366, 4
          %s368 = int_to_ptr.hbm [resolvable:$true] %s367
          %s369 = sshll.u32 [#allocation3], 4
          %s370 = int_to_ptr.vmem [resolvable:$true] %s369
          %375 = dma.hbm_to_vmem [thread:$0]  %s368, 256, %s370, [#allocation4], 128, 128, 8
        $region16: #{tpu_custom_call.1} parent=11 // pred_fallthru
          _
        // Predicated region
        $region17: #{tpu_custom_call.1} parent=11 // pred_check
          %p376 = pneg %p84
        $region18: #{tpu_custom_call.1} parent=11 // pred_check_branch
          %378 = sbr.rel (%p376) target = $region20
        $region19: #{tpu_custom_call.1} parent=11 // pred_region
          %s379 = smul.u32 2, %s29
          %381 = vsyncadd [#allocation7], 0
          %s382 = smul.addr %s379, 2
          %s383 = smul.addr %s382, 4
          %s384 = scalar_lea.hbm %s1, %s383
          %s385 = sshll.u32 %s384, 4
          %s386 = int_to_ptr.hbm [resolvable:$true] %s385
          %s387 = sshll.u32 [#allocation6], 4
          %s388 = int_to_ptr.vmem [resolvable:$true] %s387
          %393 = dma.hbm_to_vmem [thread:$0]  %s386, 256, %s388, [#allocation7], 64, 64, 4
        $region20: #{tpu_custom_call.1} parent=11 // pred_fallthru
          _
      $region12: #{tpu_custom_call.1} parent=5 // pred_fallthru
        _
      %p394 = scmp.lt.s32.totalorder %s20, 2
      // Predicated region
      $region21: #{tpu_custom_call.1} parent=5 // pred_check
        %p395 = pneg %p394
      $region22: #{tpu_custom_call.1} parent=5 // pred_check_branch
        %397 = sbr.rel (%p395) target = $region24
      $region23: #{tpu_custom_call.1} parent=5 // pred_region
        // Predicated region
        $region25: #{tpu_custom_call.1} parent=23 // pred_check
          %p398 = pneg %p104
        $region26: #{tpu_custom_call.1} parent=23 // pred_check_branch
          %400 = sbr.rel (%p398) target = $region28
        $region27: #{tpu_custom_call.1} parent=23 // pred_region
          %p401 = scmp.lt.s32.totalorder %s28, 1
          %s402 = scalar_select %p401, %s28, 1
          %s403 = smul.addr %s402, 4
          %s404 = smul.addr %s403, 4
          %s405 = scalar_lea.vmem %s2, %s404
        $region28: #{tpu_custom_call.1} parent=23 // pred_fallthru
          _
        // Predicated region
        $region29: #{tpu_custom_call.1} parent=23 // pred_check
          %p406 = pneg %p130
        $region30: #{tpu_custom_call.1} parent=23 // pred_check_branch
          %408 = sbr.rel (%p406) target = $region32
        $region31: #{tpu_custom_call.1} parent=23 // pred_region
          %p409 = scmp.lt.s32.totalorder %s28, 1
          %s410 = scalar_select %p409, %s28, 1
          %s411 = smul.addr %s410, 4
          %s412 = smul.addr %s411, 4
          %s413 = scalar_lea.vmem %s3, %s412
        $region32: #{tpu_custom_call.1} parent=23 // pred_fallthru
          _
        // Predicated region
        $region33: #{tpu_custom_call.1} parent=23 // pred_check
          %p414 = pneg %p156
        $region34: #{tpu_custom_call.1} parent=23 // pred_check_branch
          %416 = sbr.rel (%p414) target = $region36
        $region35: #{tpu_custom_call.1} parent=23 // pred_region
          %p417 = scmp.lt.s32.totalorder %s28, 1
          %s418 = scalar_select %p417, %s28, 1
          %s419 = smul.addr %s418, 4
          %s420 = smul.addr %s419, 4
          %s421 = scalar_lea.vmem %s4, %s420
        $region36: #{tpu_custom_call.1} parent=23 // pred_fallthru
          _
        // Predicated region
        $region37: #{tpu_custom_call.1} parent=23 // pred_check
          %p422 = pneg %p182
        $region38: #{tpu_custom_call.1} parent=23 // pred_check_branch
          %424 = sbr.rel (%p422) target = $region40
        $region39: #{tpu_custom_call.1} parent=23 // pred_region
          %s425 = sand.u32 %s20, 1
          %s426 = scalar_lea.sflag [#allocation4], %s425
          %s427 = sand.u32 %s172, 1
          %s428 = smul.addr %s427, 16
          %s429 = scalar_lea.vmem [#allocation8], %s428
          %431 = vsyncadd %s426, 0
          %s432 = smul.addr %s28, 4
          %s433 = smul.addr %s432, 4
          %s434 = scalar_lea.hbm %s5, %s433
          %s435 = sshll.u32 %s434, 4
          %s436 = int_to_ptr.hbm [resolvable:$true] %s435
          %s437 = sshll.u32 %s429, 4
          %s438 = int_to_ptr.vmem [resolvable:$true] %s437
          %443 = dma.hbm_to_vmem [thread:$0]  %s436, 256, %s438, %s426, 64, 64, 4
        $region40: #{tpu_custom_call.1} parent=23 // pred_fallthru
          _
        // Predicated region
        $region41: #{tpu_custom_call.1} parent=23 // pred_check
          %p444 = pneg %p208
        $region42: #{tpu_custom_call.1} parent=23 // pred_check_branch
          %446 = sbr.rel (%p444) target = $region44
        $region43: #{tpu_custom_call.1} parent=23 // pred_region
          %s447 = sand.u32 %s20, 1
          %s448 = scalar_lea.sflag [#allocation4], %s447
          %s449 = sand.u32 %s198, 1
          %s450 = smul.addr %s449, 16
          %s451 = scalar_lea.vmem [#allocation9], %s450
          %453 = vsyncadd %s448, 0
          %s454 = smul.addr %s28, 4
          %s455 = smul.addr %s454, 4
          %s456 = scalar_lea.hbm %s6, %s455
          %s457 = sshll.u32 %s456, 4
          %s458 = int_to_ptr.hbm [resolvable:$true] %s457
          %s459 = sshll.u32 %s451, 4
          %s460 = int_to_ptr.vmem [resolvable:$true] %s459
          %465 = dma.hbm_to_vmem [thread:$0]  %s458, 256, %s460, %s448, 64, 64, 4
        $region44: #{tpu_custom_call.1} parent=23 // pred_fallthru
          _
        // Predicated region
        $region45: #{tpu_custom_call.1} parent=23 // pred_check
          %p466 = pneg %p234
        $region46: #{tpu_custom_call.1} parent=23 // pred_check_branch
          %468 = sbr.rel (%p466) target = $region48
        $region47: #{tpu_custom_call.1} parent=23 // pred_region
          %s469 = sand.u32 %s20, 1
          %s470 = scalar_lea.sflag [#allocation4], %s469
          %s471 = sand.u32 %s224, 1
          %s472 = smul.addr %s471, 16
          %s473 = scalar_lea.vmem [#allocation10], %s472
          %475 = vsyncadd %s470, 0
          %s476 = smul.addr %s28, 4
          %s477 = smul.addr %s476, 4
          %s478 = scalar_lea.hbm %s7, %s477
          %s479 = sshll.u32 %s478, 4
          %s480 = int_to_ptr.hbm [resolvable:$true] %s479
          %s481 = sshll.u32 %s473, 4
          %s482 = int_to_ptr.vmem [resolvable:$true] %s481
          %487 = dma.hbm_to_vmem [thread:$0]  %s480, 256, %s482, %s470, 64, 64, 4
        $region48: #{tpu_custom_call.1} parent=23 // pred_fallthru
          _
        // Predicated region
        $region49: #{tpu_custom_call.1} parent=23 // pred_check
          %p488 = pneg %p260
        $region50: #{tpu_custom_call.1} parent=23 // pred_check_branch
          %490 = sbr.rel (%p488) target = $region52
        $region51: #{tpu_custom_call.1} parent=23 // pred_region
          %p491 = scmp.lt.s32.totalorder %s28, 1
          %s492 = scalar_select %p491, %s28, 1
          %s493 = smul.addr %s492, 8
          %s494 = smul.addr %s493, 4
          %s495 = scalar_lea.vmem %s8, %s494
        $region52: #{tpu_custom_call.1} parent=23 // pred_fallthru
          _
        // Predicated region
        $region53: #{tpu_custom_call.1} parent=23 // pred_check
          %p496 = pneg %p286
        $region54: #{tpu_custom_call.1} parent=23 // pred_check_branch
          %498 = sbr.rel (%p496) target = $region56
        $region55: #{tpu_custom_call.1} parent=23 // pred_region
          %s499 = sand.u32 %s20, 1
          %s500 = scalar_lea.sflag [#allocation4], %s499
          %s501 = sand.u32 %s276, 1
          %s502 = smul.addr %s501, 16
          %s503 = scalar_lea.vmem [#allocation11], %s502
          %505 = vsyncadd %s500, 0
          %s506 = smul.addr %s28, 2
          %s507 = smul.addr %s506, 8
          %s508 = scalar_lea.hbm %s9, %s507
          %s509 = sshll.u32 %s508, 4
          %s510 = int_to_ptr.hbm [resolvable:$true] %s509
          %s511 = sshll.u32 %s503, 4
          %s512 = int_to_ptr.vmem [resolvable:$true] %s511
          %517 = dma.hbm_to_vmem [thread:$0]  %s510, 256, %s512, %s500, 128, 128, 8
        $region56: #{tpu_custom_call.1} parent=23 // pred_fallthru
          _
        // Predicated region
        $region57: #{tpu_custom_call.1} parent=23 // pred_check
          %p518 = pneg %p312
        $region58: #{tpu_custom_call.1} parent=23 // pred_check_branch
          %520 = sbr.rel (%p518) target = $region60
        $region59: #{tpu_custom_call.1} parent=23 // pred_region
          %p521 = scmp.lt.s32.totalorder %s28, 1
          %s522 = scalar_select %p521, %s28, 1
          %s523 = scalar_lea.vmem %s10, %s522
        $region60: #{tpu_custom_call.1} parent=23 // pred_fallthru
          _
      $region24: #{tpu_custom_call.1} parent=5 // pred_fallthru
        _
      %p524 = scmp.le.s32.totalorder 1, %s20
      %p525 = scmp.lt.s32.totalorder %s20, 3
      %p526 = pnand %p524, %p525
      %p527 = pneg %p526
      // Predicated region
      $region61: #{tpu_custom_call.1} parent=5 // pred_check
        _
      $region62: #{tpu_custom_call.1} parent=5 // pred_check_branch
        %529 = sbr.rel (%p526) target = $region64
      $region63: #{tpu_custom_call.1} parent=5 // pred_region
        %s530 = ssub.s32 %s20, 1
        // Predicated region
        $region65: #{tpu_custom_call.1} parent=63 // pred_check
          %p531 = pneg %p58
        $region66: #{tpu_custom_call.1} parent=63 // pred_check_branch
          %533 = sbr.rel (%p531) target = $region68
        $region67: #{tpu_custom_call.1} parent=63 // pred_region
          %535 = dma.done [#allocation4], 256
        $region68: #{tpu_custom_call.1} parent=63 // pred_fallthru
          _
        // Predicated region
        $region69: #{tpu_custom_call.1} parent=63 // pred_check
          %p536 = pneg %p84
        $region70: #{tpu_custom_call.1} parent=63 // pred_check_branch
          %538 = sbr.rel (%p536) target = $region72
        $region71: #{tpu_custom_call.1} parent=63 // pred_region
          %540 = dma.done [#allocation7], 256
        $region72: #{tpu_custom_call.1} parent=63 // pred_fallthru
          _
        %s541 = sand.u32 %s25, 1
        %s542 = scalar_lea.sflag [#allocation4], %s541
        %s543 = sand.u32 %s175, 1
        %s544 = smul.addr %s543, 16
        %s545 = scalar_lea.vmem [#allocation8], %s544
        // Predicated region
        $region73: #{tpu_custom_call.1} parent=63 // pred_check
          %p546 = pneg %p188
        $region74: #{tpu_custom_call.1} parent=63 // pred_check_branch
          %548 = sbr.rel (%p546) target = $region76
        $region75: #{tpu_custom_call.1} parent=63 // pred_region
          %550 = dma.done %s542, 256
        $region76: #{tpu_custom_call.1} parent=63 // pred_fallthru
          _
        %s551 = sand.u32 %s25, 1
        %s552 = scalar_lea.sflag [#allocation4], %s551
        %s553 = sand.u32 %s201, 1
        %s554 = smul.addr %s553, 16
        %s555 = scalar_lea.vmem [#allocation9], %s554
        // Predicated region
        $region77: #{tpu_custom_call.1} parent=63 // pred_check
          %p556 = pneg %p214
        $region78: #{tpu_custom_call.1} parent=63 // pred_check_branch
          %558 = sbr.rel (%p556) target = $region80
        $region79: #{tpu_custom_call.1} parent=63 // pred_region
          %560 = dma.done %s552, 256
        $region80: #{tpu_custom_call.1} parent=63 // pred_fallthru
          _
        %s561 = sand.u32 %s25, 1
        %s562 = scalar_lea.sflag [#allocation4], %s561
        %s563 = sand.u32 %s227, 1
        %s564 = smul.addr %s563, 16
        %s565 = scalar_lea.vmem [#allocation10], %s564
        // Predicated region
        $region81: #{tpu_custom_call.1} parent=63 // pred_check
          %p566 = pneg %p240
        $region82: #{tpu_custom_call.1} parent=63 // pred_check_branch
          %568 = sbr.rel (%p566) target = $region84
        $region83: #{tpu_custom_call.1} parent=63 // pred_region
          %570 = dma.done %s562, 256
        $region84: #{tpu_custom_call.1} parent=63 // pred_fallthru
          _
        %s571 = sand.u32 %s25, 1
        %s572 = scalar_lea.sflag [#allocation4], %s571
        %s573 = sand.u32 %s279, 1
        %s574 = smul.addr %s573, 16
        %s575 = scalar_lea.vmem [#allocation11], %s574
        // Predicated region
        $region85: #{tpu_custom_call.1} parent=63 // pred_check
          %p576 = pneg %p292
        $region86: #{tpu_custom_call.1} parent=63 // pred_check_branch
          %578 = sbr.rel (%p576) target = $region88
        $region87: #{tpu_custom_call.1} parent=63 // pred_region
          %580 = dma.done %s572, 256
        $region88: #{tpu_custom_call.1} parent=63 // pred_fallthru
          _
        %p581 = pneg %p58
        %p582 = pneg %p55
        %p583 = pneg %p84
        %p584 = pneg %p81
        %p585 = scmp.lt.s32.totalorder %s30, 1
        %s586 = scalar_select %p585, %s30, 1
        %s587 = smul.addr %s586, 4
        %s588 = smul.addr %s587, 4
        %s589 = scalar_lea.vmem %s2, %s588
        %p590 = pneg %p110
        %p591 = pneg %p107
        %p592 = scmp.lt.s32.totalorder %s30, 1
        %s593 = scalar_select %p592, %s30, 1
        %s594 = smul.addr %s593, 4
        %s595 = smul.addr %s594, 4
        %s596 = scalar_lea.vmem %s3, %s595
        %p597 = pneg %p136
        %p598 = pneg %p133
        %p599 = scmp.lt.s32.totalorder %s30, 1
        %s600 = scalar_select %p599, %s30, 1
        %s601 = smul.addr %s600, 4
        %s602 = smul.addr %s601, 4
        %s603 = scalar_lea.vmem %s4, %s602
        %p604 = pneg %p162
        %p605 = pneg %p159
        %s606 = sand.u32 %s25, 1
        %s607 = scalar_lea.sflag [#allocation4], %s606
        %s608 = sand.u32 %s175, 1
        %s609 = smul.addr %s608, 16
        %s610 = scalar_lea.vmem [#allocation8], %s609
        %p611 = pneg %p188
        %p612 = pneg %p185
        %s613 = sand.u32 %s25, 1
        %s614 = scalar_lea.sflag [#allocation4], %s613
        %s615 = sand.u32 %s201, 1
        %s616 = smul.addr %s615, 16
        %s617 = scalar_lea.vmem [#allocation9], %s616
        %p618 = pneg %p214
        %p619 = pneg %p211
        %s620 = sand.u32 %s25, 1
        %s621 = scalar_lea.sflag [#allocation4], %s620
        %s622 = sand.u32 %s227, 1
        %s623 = smul.addr %s622, 16
        %s624 = scalar_lea.vmem [#allocation10], %s623
        %p625 = pneg %p240
        %p626 = pneg %p237
        %p627 = scmp.lt.s32.totalorder %s30, 1
        %s628 = scalar_select %p627, %s30, 1
        %s629 = smul.addr %s628, 8
        %s630 = smul.addr %s629, 4
        %s631 = scalar_lea.vmem %s8, %s630
        %p632 = pneg %p266
        %p633 = pneg %p263
        %s634 = sand.u32 %s25, 1
        %s635 = scalar_lea.sflag [#allocation4], %s634
        %s636 = sand.u32 %s279, 1
        %s637 = smul.addr %s636, 16
        %s638 = scalar_lea.vmem [#allocation11], %s637
        %p639 = pneg %p292
        %p640 = pneg %p289
        %p641 = scmp.lt.s32.totalorder %s30, 1
        %s642 = scalar_select %p641, %s30, 1
        %s643 = scalar_lea.vmem %s10, %s642
        %p644 = pneg %p318
        %p645 = pneg %p315
        %p646 = pneg %p344
        %p647 = pneg %p341
        %s648 = smul.u32 2, %s29
        %s649 = smul.u32 2, %s29
        %p650 = scmp.lt.s32.totalorder %s30, 1
        %s651 = scalar_select %p650, %s30, 1
        %s652 = smul.addr %s651, 4
        %s653 = smul.addr %s652, 4
        %s654 = scalar_lea.vmem %s2, %s653
        %p655 = scmp.lt.s32.totalorder %s30, 1
        %s656 = scalar_select %p655, %s30, 1
        %s657 = smul.addr %s656, 4
        %s658 = smul.addr %s657, 4
        %s659 = scalar_lea.vmem %s3, %s658
        %p660 = scmp.lt.s32.totalorder %s30, 1
        %s661 = scalar_select %p660, %s30, 1
        %s662 = smul.addr %s661, 4
        %s663 = smul.addr %s662, 4
        %s664 = scalar_lea.vmem %s4, %s663
        %p665 = scmp.lt.s32.totalorder %s30, 1
        %s666 = scalar_select %p665, %s30, 1
        %s667 = smul.addr %s666, 8
        %s668 = smul.addr %s667, 4
        %s669 = scalar_lea.vmem %s8, %s668
        %p670 = scmp.lt.s32.totalorder %s30, 1
        %s671 = scalar_select %p670, %s30, 1
        %s672 = scalar_lea.vmem %s10, %s671
        %s673 = smul.u32 2, %s29
        %p675 = scmp.eq.s32.totalorder %s30, 0
        // Predicated region
        $region89: #{tpu_custom_call.1} parent=63 // pred_check
          %p676 = pneg %p675
        $region90: #{tpu_custom_call.1} parent=63 // pred_check_branch
          %678 = sbr.rel (%p676) target = $region92
        $region91: #{tpu_custom_call.1} parent=63 // pred_region
          %v679 = vld [vmem:[#allocation3] sm:$0xff]
          %v680 = vld [vmem:[#allocation3 + $0x8] sm:$0xff]
          %vm681 = vcmask 261120
          %682 = vst.msk [vmem:[#allocation2] sm:$0xff] %vm681, %v679
          %683 = vst.msk [vmem:[#allocation2 + $0x8] sm:$0xff] %vm681, %v680
        $region92: #{tpu_custom_call.1} parent=63 // pred_fallthru
          _
        %v684 = vld [vmem:[#allocation2] sm:$0xff]
        %v685 = vld [vmem:[#allocation2 + $0x8] sm:$0xff]
        %v686 = vld [vmem:[#allocation6] sm:$0xf]
        %v687 = vld [vmem:[#allocation6 + $0x4] sm:$0xf]
        %v688 = vld [vmem:[#allocation6 + $0x8] sm:$0xf]
        %v689 = vld [vmem:[#allocation6 + $0xc] sm:$0xf]
        %v690 = vld [vmem:[%s575] sm:$0xff]
        %v691 = vld [vmem:[%s575 + $0x8] sm:$0xff]
        %v692 = vld [vmem:[%s672] sm:$0x1]
        %v693 = vld [vmem:[%s654] sm:$0xf]
        %v694 = vld [vmem:[%s654 + $0x4] sm:$0xf]
        %v695 = vld [vmem:[%s654 + $0x8] sm:$0xf]
        %v696 = vld [vmem:[%s654 + $0xc] sm:$0xf]
        %v697 = vld [vmem:[%s659] sm:$0xf]
        %v698 = vld [vmem:[%s659 + $0x4] sm:$0xf]
        %v699 = vld [vmem:[%s659 + $0x8] sm:$0xf]
        %v700 = vld [vmem:[%s659 + $0xc] sm:$0xf]
        %v701 = vld [vmem:[%s664] sm:$0xf]
        %v702 = vld [vmem:[%s664 + $0x4] sm:$0xf]
        %v703 = vld [vmem:[%s664 + $0x8] sm:$0xf]
        %v704 = vld [vmem:[%s664 + $0xc] sm:$0xf]
        %v705 = vld [vmem:[%s545] sm:$0xf]
        %v706 = vld [vmem:[%s545 + $0x4] sm:$0xf]
        %v707 = vld [vmem:[%s545 + $0x8] sm:$0xf]
        %v708 = vld [vmem:[%s545 + $0xc] sm:$0xf]
        %v709 = vld [vmem:[%s555] sm:$0xf]
        %v710 = vld [vmem:[%s555 + $0x4] sm:$0xf]
        %v711 = vld [vmem:[%s555 + $0x8] sm:$0xf]
        %v712 = vld [vmem:[%s555 + $0xc] sm:$0xf]
        %v713 = vld [vmem:[%s565] sm:$0xf]
        %v714 = vld [vmem:[%s565 + $0x4] sm:$0xf]
        %v715 = vld [vmem:[%s565 + $0x8] sm:$0xf]
        %v716 = vld [vmem:[%s565 + $0xc] sm:$0xf]
        %v717 = vld [vmem:[%s669] sm:$0xf]
        %v718 = vld [vmem:[%s669 + $0x4] sm:$0xf]
        %v719 = vld [vmem:[%s669 + $0x8] sm:$0xf]
        %v720 = vld [vmem:[%s669 + $0xc] sm:$0xf]
        %v721 = vld [vmem:[%s669 + $0x10] sm:$0xf]
        %v722 = vld [vmem:[%s669 + $0x14] sm:$0xf]
        %v723 = vld [vmem:[%s669 + $0x18] sm:$0xf]
        %v724 = vld [vmem:[%s669 + $0x1c] sm:$0xf]
        %v725 = vpack.c.bf16 %v685, %v684
        %v730 = vunpack.c.l.b16 %v693
        %v731 = vunpack.c.l.b16 %v694
        %v732 = vunpack.c.l.b16 %v695
        %v733 = vunpack.c.l.b16 %v696
        %v734 = vpack.c.b16 %v731, %v730
        %v735 = vpack.c.b16 %v733, %v732
        %vm738 = vcmask 261120
        %v740 = vsel %vm738, %v725, 0
        %742 = vmatpush.bf16.msra.mxu0 0
        %743 = vmatpush.bf16.msra.mxu0 0
        %744 = vmatpush.bf16.msra.mxu0 0
        %745 = vmatpush.bf16.msra.mxu0 0
        %746 = vmatpush.bf16.msra.mxu0 0
        %747 = vmatpush.bf16.msra.mxu0 0
        %748 = vmatpush.bf16.msra.mxu0 %v735
        %749 = vmatpush.bf16.msra.mxu0 %v734
        %750 = vmatmul.bf16.gmra.mxu0 %v740
        %v751 = vpop.f32.mrf.mxu0
        %v752 = vadd.f32 0.0, %v751
        %v753 = vpop.f32.mrf.mxu0
        %v754 = vadd.f32 0.0, %v753
        %755 = vdwg.mxu0
        %v756 = vperm.slane %v690, 0
        %v757 = vadd.f32 %v752, %v756
        %v758 = vadd.f32 %v754, %v756
        %v759 = vperm.slane %v690, 1
        %761 = vrot.lane.b32.xlu0 %v759, 32
        %v762 = vpop.permute.xlu0 %761
        %v764 = vadd.f32 %v752, %v762
        %v765 = vadd.f32 %v754, %v762
        %v766 = vperm.slane %v690, 2
        %768 = vrot.lane.b32.xlu0 %v766, 64
        %v769 = vpop.permute.xlu0 %768
        %v771 = vadd.f32 %v752, %v769
        %v772 = vadd.f32 %v754, %v769
        %v773 = vmul.f32 %v757, 0.35355338
        %v774 = vmul.f32 %v758, 0.35355338
        %v775 = vpack.c.bf16 %v773, %v773
        %v776 = vpack.c.bf16 %v774, %v774
        %v777 = vpack.c.bf16 %v764, %v764
        %v778 = vpack.c.bf16 %v765, %v765
        %v779 = vpack.c.bf16 %v771, %v771
        %v780 = vpack.c.bf16 %v772, %v772
        %783 = vrot.lane.b32.xlu0 %v775, 120
        %v784 = vpop.permute.xlu0 %783
        %785 = vrot.lane.b32.xlu0 %v776, 120
        %v786 = vpop.permute.xlu0 %785
        %787 = vrot.lane.b32.xlu0 %v775, 112
        %v788 = vpop.permute.xlu0 %787
        %789 = vrot.lane.b32.xlu0 %v776, 112
        %v790 = vpop.permute.xlu0 %789
        %791 = vrot.lane.b32.xlu0 %v775, 104
        %v792 = vpop.permute.xlu0 %791
        %793 = vrot.lane.b32.xlu0 %v776, 104
        %v794 = vpop.permute.xlu0 %793
        %797 = vrot.lane.b32.xlu0 %v777, 120
        %v798 = vpop.permute.xlu0 %797
        %799 = vrot.lane.b32.xlu0 %v778, 120
        %v800 = vpop.permute.xlu0 %799
        %801 = vrot.lane.b32.xlu0 %v777, 112
        %v802 = vpop.permute.xlu0 %801
        %803 = vrot.lane.b32.xlu0 %v778, 112
        %v804 = vpop.permute.xlu0 %803
        %805 = vrot.lane.b32.xlu0 %v777, 104
        %v806 = vpop.permute.xlu0 %805
        %807 = vrot.lane.b32.xlu0 %v778, 104
        %v808 = vpop.permute.xlu0 %807
        %811 = vrot.lane.b32.xlu0 %v779, 120
        %v812 = vpop.permute.xlu0 %811
        %813 = vrot.lane.b32.xlu0 %v780, 120
        %v814 = vpop.permute.xlu0 %813
        %815 = vrot.lane.b32.xlu0 %v779, 112
        %v816 = vpop.permute.xlu0 %815
        %817 = vrot.lane.b32.xlu0 %v780, 112
        %v818 = vpop.permute.xlu0 %817
        %819 = vrot.lane.b32.xlu0 %v779, 104
        %v820 = vpop.permute.xlu0 %819
        %821 = vrot.lane.b32.xlu0 %v780, 104
        %v822 = vpop.permute.xlu0 %821
        %v823 = vlaneseq
        %v824 = vshrl.u32 %v823, 7
        %v825 = vlaneseq
        %v826 = vand.u32 %v825, 127
        %vm827 = vcmp.gt.s32.totalorder %v826, %v824
        %v828 = vsel %vm827, -1e+30, 0.0
        %v829 = vunpack.c.l.b16 %v777
        %v830 = vpack.c.b16 %v829, %v829
        %831 = vrot.lane.b32.xlu0 %v830, 96
        %v832 = vpop.permute.xlu0 %831
        %vm833 = vcmask 64512
        %v835 = vsel %vm833, %v775, 0
        %v838 = vsel %vm833, %v832, 0
        %840 = vmatpush.bf16.xpose.msra.mxu0 0
        %841 = vmatpush.bf16.xpose.msra.mxu0 0
        %842 = vmatpush.bf16.xpose.msra.mxu0 0
        %843 = vmatpush.bf16.xpose.msra.mxu0 0
        %844 = vmatpush.bf16.xpose.msra.mxu0 0
        %845 = vmatpush.bf16.xpose.msra.mxu0 0
        %846 = vmatpush.bf16.xpose.msra.mxu0 0
        %847 = vmatpush.bf16.xpose.msra.mxu0 %v838
        %848 = vmatmul.bf16.gmra.mxu0 %v835
        %v849 = vpop.f32.mrf.mxu0
        %v850 = vadd.f32 %v828, %v849
        %v851 = vpop.f32.mrf.mxu0
        %852 = vdwg.mxu0
        %v853 = vunpack.c.l.b16 %v778
        %v854 = vpack.c.b16 %v853, %v853
        %855 = vrot.lane.b32.xlu0 %v854, 96
        %v856 = vpop.permute.xlu0 %855
        %v858 = vsel %vm833, %v776, 0
        %v861 = vsel %vm833, %v856, 0
        %863 = vmatpush.bf16.xpose.msra.mxu0 0
        %864 = vmatpush.bf16.xpose.msra.mxu0 0
        %865 = vmatpush.bf16.xpose.msra.mxu0 0
        %866 = vmatpush.bf16.xpose.msra.mxu0 0
        %867 = vmatpush.bf16.xpose.msra.mxu0 0
        %868 = vmatpush.bf16.xpose.msra.mxu0 0
        %869 = vmatpush.bf16.xpose.msra.mxu0 0
        %870 = vmatpush.bf16.xpose.msra.mxu0 %v861
        %871 = vmatmul.bf16.gmra.mxu0 %v858
        %v872 = vpop.f32.mrf.mxu0
        %v873 = vadd.f32 %v828, %v872
        %v874 = vpop.f32.mrf.mxu0
        %875 = vdwg.mxu0
        %v876 = vunpack.c.l.b16 %v798
        %v877 = vpack.c.b16 %v876, %v876
        %878 = vrot.lane.b32.xlu0 %v877, 96
        %v879 = vpop.permute.xlu0 %878
        %v881 = vsel %vm833, %v784, 0
        %v884 = vsel %vm833, %v879, 0
        %886 = vmatpush.bf16.xpose.msra.mxu0 0
        %887 = vmatpush.bf16.xpose.msra.mxu0 0
        %888 = vmatpush.bf16.xpose.msra.mxu0 0
        %889 = vmatpush.bf16.xpose.msra.mxu0 0
        %890 = vmatpush.bf16.xpose.msra.mxu0 0
        %891 = vmatpush.bf16.xpose.msra.mxu0 0
        %892 = vmatpush.bf16.xpose.msra.mxu0 0
        %893 = vmatpush.bf16.xpose.msra.mxu0 %v884
        %894 = vmatmul.bf16.gmra.mxu0 %v881
        %v895 = vpop.f32.mrf.mxu0
        %v896 = vadd.f32 %v828, %v895
        %v897 = vpop.f32.mrf.mxu0
        %898 = vdwg.mxu0
        %v899 = vunpack.c.l.b16 %v800
        %v900 = vpack.c.b16 %v899, %v899
        %901 = vrot.lane.b32.xlu0 %v900, 96
        %v902 = vpop.permute.xlu0 %901
        %v904 = vsel %vm833, %v786, 0
        %v907 = vsel %vm833, %v902, 0
        %909 = vmatpush.bf16.xpose.msra.mxu0 0
        %910 = vmatpush.bf16.xpose.msra.mxu0 0
        %911 = vmatpush.bf16.xpose.msra.mxu0 0
        %912 = vmatpush.bf16.xpose.msra.mxu0 0
        %913 = vmatpush.bf16.xpose.msra.mxu0 0
        %914 = vmatpush.bf16.xpose.msra.mxu0 0
        %915 = vmatpush.bf16.xpose.msra.mxu0 0
        %916 = vmatpush.bf16.xpose.msra.mxu0 %v907
        %917 = vmatmul.bf16.gmra.mxu0 %v904
        %v918 = vpop.f32.mrf.mxu0
        %v919 = vadd.f32 %v828, %v918
        %v920 = vpop.f32.mrf.mxu0
        %921 = vdwg.mxu0
        %v922 = vunpack.c.l.b16 %v802
        %v923 = vpack.c.b16 %v922, %v922
        %924 = vrot.lane.b32.xlu0 %v923, 96
        %v925 = vpop.permute.xlu0 %924
        %v927 = vsel %vm833, %v788, 0
        %v930 = vsel %vm833, %v925, 0
        %932 = vmatpush.bf16.xpose.msra.mxu0 0
        %933 = vmatpush.bf16.xpose.msra.mxu0 0
        %934 = vmatpush.bf16.xpose.msra.mxu0 0
        %935 = vmatpush.bf16.xpose.msra.mxu0 0
        %936 = vmatpush.bf16.xpose.msra.mxu0 0
        %937 = vmatpush.bf16.xpose.msra.mxu0 0
        %938 = vmatpush.bf16.xpose.msra.mxu0 0
        %939 = vmatpush.bf16.xpose.msra.mxu0 %v930
        %940 = vmatmul.bf16.gmra.mxu0 %v927
        %v941 = vpop.f32.mrf.mxu0
        %v942 = vadd.f32 %v828, %v941
        %v943 = vpop.f32.mrf.mxu0
        %944 = vdwg.mxu0
        %v945 = vunpack.c.l.b16 %v804
        %v946 = vpack.c.b16 %v945, %v945
        %947 = vrot.lane.b32.xlu0 %v946, 96
        %v948 = vpop.permute.xlu0 %947
        %v950 = vsel %vm833, %v790, 0
        %v953 = vsel %vm833, %v948, 0
        %955 = vmatpush.bf16.xpose.msra.mxu0 0
        %956 = vmatpush.bf16.xpose.msra.mxu0 0
        %957 = vmatpush.bf16.xpose.msra.mxu0 0
        %958 = vmatpush.bf16.xpose.msra.mxu0 0
        %959 = vmatpush.bf16.xpose.msra.mxu0 0
        %960 = vmatpush.bf16.xpose.msra.mxu0 0
        %961 = vmatpush.bf16.xpose.msra.mxu0 0
        %962 = vmatpush.bf16.xpose.msra.mxu0 %v953
        %963 = vmatmul.bf16.gmra.mxu0 %v950
        %v964 = vpop.f32.mrf.mxu0
        %v965 = vadd.f32 %v828, %v964
        %v966 = vpop.f32.mrf.mxu0
        %967 = vdwg.mxu0
        %v968 = vunpack.c.l.b16 %v806
        %v969 = vpack.c.b16 %v968, %v968
        %970 = vrot.lane.b32.xlu0 %v969, 96
        %v971 = vpop.permute.xlu0 %970
        %v973 = vsel %vm833, %v792, 0
        %v976 = vsel %vm833, %v971, 0
        %978 = vmatpush.bf16.xpose.msra.mxu0 0
        %979 = vmatpush.bf16.xpose.msra.mxu0 0
        %980 = vmatpush.bf16.xpose.msra.mxu0 0
        %981 = vmatpush.bf16.xpose.msra.mxu0 0
        %982 = vmatpush.bf16.xpose.msra.mxu0 0
        %983 = vmatpush.bf16.xpose.msra.mxu0 0
        %984 = vmatpush.bf16.xpose.msra.mxu0 0
        %985 = vmatpush.bf16.xpose.msra.mxu0 %v976
        %986 = vmatmul.bf16.gmra.mxu0 %v973
        %v987 = vpop.f32.mrf.mxu0
        %v988 = vadd.f32 %v828, %v987
        %v989 = vpop.f32.mrf.mxu0
        %990 = vdwg.mxu0
        %v991 = vunpack.c.l.b16 %v808
        %v992 = vpack.c.b16 %v991, %v991
        %993 = vrot.lane.b32.xlu0 %v992, 96
        %v994 = vpop.permute.xlu0 %993
        %v996 = vsel %vm833, %v794, 0
        %v999 = vsel %vm833, %v994, 0
        %1001 = vmatpush.bf16.xpose.msra.mxu0 0
        %1002 = vmatpush.bf16.xpose.msra.mxu0 0
        %1003 = vmatpush.bf16.xpose.msra.mxu0 0
        %1004 = vmatpush.bf16.xpose.msra.mxu0 0
        %1005 = vmatpush.bf16.xpose.msra.mxu0 0
        %1006 = vmatpush.bf16.xpose.msra.mxu0 0
        %1007 = vmatpush.bf16.xpose.msra.mxu0 0
        %1008 = vmatpush.bf16.xpose.msra.mxu0 %v999
        %1009 = vmatmul.bf16.gmra.mxu0 %v996
        %v1010 = vpop.f32.mrf.mxu0
        %v1011 = vadd.f32 %v828, %v1010
        %v1012 = vpop.f32.mrf.mxu0
        %1013 = vdwg.mxu0
        %v1014 = vsel %vm833, %v850, -inf
        %1015 = vmax.xlane.f32.xlu0 %v1014
        %v1016 = vpop.xlane.xlu0 %1015
        %v1017 = vsel %vm833, %v873, -inf
        %1018 = vmax.xlane.f32.xlu0 %v1017
        %v1019 = vpop.xlane.xlu0 %1018
        %v1020 = vsel %vm833, %v896, -inf
        %1021 = vmax.xlane.f32.xlu0 %v1020
        %v1022 = vpop.xlane.xlu0 %1021
        %v1023 = vsel %vm833, %v919, -inf
        %1024 = vmax.xlane.f32.xlu0 %v1023
        %v1025 = vpop.xlane.xlu0 %1024
        %v1026 = vsel %vm833, %v942, -inf
        %1027 = vmax.xlane.f32.xlu0 %v1026
        %v1028 = vpop.xlane.xlu0 %1027
        %v1029 = vsel %vm833, %v965, -inf
        %1030 = vmax.xlane.f32.xlu0 %v1029
        %v1031 = vpop.xlane.xlu0 %1030
        %v1032 = vsel %vm833, %v988, -inf
        %1033 = vmax.xlane.f32.xlu0 %v1032
        %v1034 = vpop.xlane.xlu0 %1033
        %v1035 = vsel %vm833, %v1011, -inf
        %1036 = vmax.xlane.f32.xlu0 %v1035
        %v1037 = vpop.xlane.xlu0 %1036
        %v1038 = vsub.f32 %v850, %v1016
        %v1039 = vsub.f32 %v873, %v1019
        %v1040 = vsub.f32 %v896, %v1022
        %v1041 = vsub.f32 %v919, %v1025
        %v1042 = vsub.f32 %v942, %v1028
        %v1043 = vsub.f32 %v965, %v1031
        %v1044 = vsub.f32 %v988, %v1034
        %v1045 = vsub.f32 %v1011, %v1037
        %v1046 = vmul.f32 %v1038, 1.442695
        %v1047 = vpow.pop %v1046
        %v1048 = vmul.f32 %v1039, 1.442695
        %v1049 = vpow.pop %v1048
        %v1050 = vmul.f32 %v1040, 1.442695
        %v1051 = vpow.pop %v1050
        %v1052 = vmul.f32 %v1041, 1.442695
        %v1053 = vpow.pop %v1052
        %v1054 = vmul.f32 %v1042, 1.442695
        %v1055 = vpow.pop %v1054
        %v1056 = vmul.f32 %v1043, 1.442695
        %v1057 = vpow.pop %v1056
        %v1058 = vmul.f32 %v1044, 1.442695
        %v1059 = vpow.pop %v1058
        %v1060 = vmul.f32 %v1045, 1.442695
        %v1061 = vpow.pop %v1060
        %v1062 = vsel %vm833, %v1047, 0.0
        %1063 = vadd.xlane.f32.xlu0 %v1062
        %v1064 = vpop.xlane.xlu0 %1063
        %v1065 = vsel %vm833, %v1049, 0.0
        %1066 = vadd.xlane.f32.xlu0 %v1065
        %v1067 = vpop.xlane.xlu0 %1066
        %v1068 = vsel %vm833, %v1051, 0.0
        %1069 = vadd.xlane.f32.xlu0 %v1068
        %v1070 = vpop.xlane.xlu0 %1069
        %v1071 = vsel %vm833, %v1053, 0.0
        %1072 = vadd.xlane.f32.xlu0 %v1071
        %v1073 = vpop.xlane.xlu0 %1072
        %v1074 = vsel %vm833, %v1055, 0.0
        %1075 = vadd.xlane.f32.xlu0 %v1074
        %v1076 = vpop.xlane.xlu0 %1075
        %v1077 = vsel %vm833, %v1057, 0.0
        %1078 = vadd.xlane.f32.xlu0 %v1077
        %v1079 = vpop.xlane.xlu0 %1078
        %v1080 = vsel %vm833, %v1059, 0.0
        %1081 = vadd.xlane.f32.xlu0 %v1080
        %v1082 = vpop.xlane.xlu0 %1081
        %v1083 = vsel %vm833, %v1061, 0.0
        %1084 = vadd.xlane.f32.xlu0 %v1083
        %v1085 = vpop.xlane.xlu0 %1084
        %v1086 = vrcp.pop %v1064
        %v1087 = vrcp.pop %v1067
        %v1088 = vrcp.pop %v1070
        %v1089 = vrcp.pop %v1073
        %v1090 = vrcp.pop %v1076
        %v1091 = vrcp.pop %v1079
        %v1092 = vrcp.pop %v1082
        %v1093 = vrcp.pop %v1085
        %v1094 = vmul.f32 %v1047, %v1086
        %v1095 = vmul.f32 %v1049, %v1087
        %v1096 = vmul.f32 %v1051, %v1088
        %v1097 = vmul.f32 %v1053, %v1089
        %v1098 = vmul.f32 %v1055, %v1090
        %v1099 = vmul.f32 %v1057, %v1091
        %v1100 = vmul.f32 %v1059, %v1092
        %v1101 = vmul.f32 %v1061, %v1093
        %v1102 = vpack.c.bf16 %v1094, %v1094
        %v1103 = vpack.c.bf16 %v1095, %v1095
        %v1104 = vpack.c.bf16 %v1096, %v1096
        %v1105 = vpack.c.bf16 %v1097, %v1097
        %v1106 = vpack.c.bf16 %v1098, %v1098
        %v1107 = vpack.c.bf16 %v1099, %v1099
        %v1108 = vpack.c.bf16 %v1100, %v1100
        %v1109 = vpack.c.bf16 %v1101, %v1101
        %v1110 = vunpack.c.l.b16 %v779
        %v1111 = vpack.c.b16 %v1110, %v1110
        %1112 = vrot.lane.b32.xlu0 %v1111, 64
        %v1113 = vpop.permute.xlu0 %1112
        %v1115 = vsel %vm833, %v1102, 0
        %vm1117 = vcmask 1043456
        %v1119 = vsel %vm1117, %v1113, 0
        %1121 = vmatpush.bf16.msra.mxu0 0
        %1122 = vmatpush.bf16.msra.mxu0 0
        %1123 = vmatpush.bf16.msra.mxu0 0
        %1124 = vmatpush.bf16.msra.mxu0 0
        %1125 = vmatpush.bf16.msra.mxu0 0
        %1126 = vmatpush.bf16.msra.mxu0 0
        %1127 = vmatpush.bf16.msra.mxu0 0
        %1128 = vmatpush.bf16.msra.mxu0 %v1119
        %1129 = vmatmul.bf16.gmra.mxu0 %v1115
        %v1130 = vpop.f32.mrf.mxu0
        %v1131 = vadd.f32 0.0, %v1130
        %v1132 = vpop.f32.mrf.mxu0
        %1133 = vdwg.mxu0
        %v1134 = vunpack.c.l.b16 %v780
        %v1135 = vpack.c.b16 %v1134, %v1134
        %1136 = vrot.lane.b32.xlu0 %v1135, 64
        %v1137 = vpop.permute.xlu0 %1136
        %v1139 = vsel %vm833, %v1103, 0
        %v1142 = vsel %vm1117, %v1137, 0
        %1144 = vmatpush.bf16.msra.mxu0 0
        %1145 = vmatpush.bf16.msra.mxu0 0
        %1146 = vmatpush.bf16.msra.mxu0 0
        %1147 = vmatpush.bf16.msra.mxu0 0
        %1148 = vmatpush.bf16.msra.mxu0 0
        %1149 = vmatpush.bf16.msra.mxu0 0
        %1150 = vmatpush.bf16.msra.mxu0 0
        %1151 = vmatpush.bf16.msra.mxu0 %v1142
        %1152 = vmatmul.bf16.gmra.mxu0 %v1139
        %v1153 = vpop.f32.mrf.mxu0
        %v1154 = vadd.f32 0.0, %v1153
        %v1155 = vpop.f32.mrf.mxu0
        %1156 = vdwg.mxu0
        %v1157 = vunpack.c.l.b16 %v812
        %v1158 = vpack.c.b16 %v1157, %v1157
        %1159 = vrot.lane.b32.xlu0 %v1158, 64
        %v1160 = vpop.permute.xlu0 %1159
        %v1162 = vsel %vm833, %v1104, 0
        %v1165 = vsel %vm1117, %v1160, 0
        %1167 = vmatpush.bf16.msra.mxu0 0
        %1168 = vmatpush.bf16.msra.mxu0 0
        %1169 = vmatpush.bf16.msra.mxu0 0
        %1170 = vmatpush.bf16.msra.mxu0 0
        %1171 = vmatpush.bf16.msra.mxu0 0
        %1172 = vmatpush.bf16.msra.mxu0 0
        %1173 = vmatpush.bf16.msra.mxu0 0
        %1174 = vmatpush.bf16.msra.mxu0 %v1165
        %1175 = vmatmul.bf16.gmra.mxu0 %v1162
        %v1176 = vpop.f32.mrf.mxu0
        %v1177 = vadd.f32 0.0, %v1176
        %v1178 = vpop.f32.mrf.mxu0
        %1179 = vdwg.mxu0
        %v1180 = vunpack.c.l.b16 %v814
        %v1181 = vpack.c.b16 %v1180, %v1180
        %1182 = vrot.lane.b32.xlu0 %v1181, 64
        %v1183 = vpop.permute.xlu0 %1182
        %v1185 = vsel %vm833, %v1105, 0
        %v1188 = vsel %vm1117, %v1183, 0
        %1190 = vmatpush.bf16.msra.mxu0 0
        %1191 = vmatpush.bf16.msra.mxu0 0
        %1192 = vmatpush.bf16.msra.mxu0 0
        %1193 = vmatpush.bf16.msra.mxu0 0
        %1194 = vmatpush.bf16.msra.mxu0 0
        %1195 = vmatpush.bf16.msra.mxu0 0
        %1196 = vmatpush.bf16.msra.mxu0 0
        %1197 = vmatpush.bf16.msra.mxu0 %v1188
        %1198 = vmatmul.bf16.gmra.mxu0 %v1185
        %v1199 = vpop.f32.mrf.mxu0
        %v1200 = vadd.f32 0.0, %v1199
        %v1201 = vpop.f32.mrf.mxu0
        %1202 = vdwg.mxu0
        %v1203 = vunpack.c.l.b16 %v816
        %v1204 = vpack.c.b16 %v1203, %v1203
        %1205 = vrot.lane.b32.xlu0 %v1204, 64
        %v1206 = vpop.permute.xlu0 %1205
        %v1208 = vsel %vm833, %v1106, 0
        %v1211 = vsel %vm1117, %v1206, 0
        %1213 = vmatpush.bf16.msra.mxu0 0
        %1214 = vmatpush.bf16.msra.mxu0 0
        %1215 = vmatpush.bf16.msra.mxu0 0
        %1216 = vmatpush.bf16.msra.mxu0 0
        %1217 = vmatpush.bf16.msra.mxu0 0
        %1218 = vmatpush.bf16.msra.mxu0 0
        %1219 = vmatpush.bf16.msra.mxu0 0
        %1220 = vmatpush.bf16.msra.mxu0 %v1211
        %1221 = vmatmul.bf16.gmra.mxu0 %v1208
        %v1222 = vpop.f32.mrf.mxu0
        %v1223 = vadd.f32 0.0, %v1222
        %v1224 = vpop.f32.mrf.mxu0
        %1225 = vdwg.mxu0
        %v1226 = vunpack.c.l.b16 %v818
        %v1227 = vpack.c.b16 %v1226, %v1226
        %1228 = vrot.lane.b32.xlu0 %v1227, 64
        %v1229 = vpop.permute.xlu0 %1228
        %v1231 = vsel %vm833, %v1107, 0
        %v1234 = vsel %vm1117, %v1229, 0
        %1236 = vmatpush.bf16.msra.mxu0 0
        %1237 = vmatpush.bf16.msra.mxu0 0
        %1238 = vmatpush.bf16.msra.mxu0 0
        %1239 = vmatpush.bf16.msra.mxu0 0
        %1240 = vmatpush.bf16.msra.mxu0 0
        %1241 = vmatpush.bf16.msra.mxu0 0
        %1242 = vmatpush.bf16.msra.mxu0 0
        %1243 = vmatpush.bf16.msra.mxu0 %v1234
        %1244 = vmatmul.bf16.gmra.mxu0 %v1231
        %v1245 = vpop.f32.mrf.mxu0
        %v1246 = vadd.f32 0.0, %v1245
        %v1247 = vpop.f32.mrf.mxu0
        %1248 = vdwg.mxu0
        %v1249 = vunpack.c.l.b16 %v820
        %v1250 = vpack.c.b16 %v1249, %v1249
        %1251 = vrot.lane.b32.xlu0 %v1250, 64
        %v1252 = vpop.permute.xlu0 %1251
        %v1254 = vsel %vm833, %v1108, 0
        %v1257 = vsel %vm1117, %v1252, 0
        %1259 = vmatpush.bf16.msra.mxu0 0
        %1260 = vmatpush.bf16.msra.mxu0 0
        %1261 = vmatpush.bf16.msra.mxu0 0
        %1262 = vmatpush.bf16.msra.mxu0 0
        %1263 = vmatpush.bf16.msra.mxu0 0
        %1264 = vmatpush.bf16.msra.mxu0 0
        %1265 = vmatpush.bf16.msra.mxu0 0
        %1266 = vmatpush.bf16.msra.mxu0 %v1257
        %1267 = vmatmul.bf16.gmra.mxu0 %v1254
        %v1268 = vpop.f32.mrf.mxu0
        %v1269 = vadd.f32 0.0, %v1268
        %v1270 = vpop.f32.mrf.mxu0
        %1271 = vdwg.mxu0
        %v1272 = vunpack.c.l.b16 %v822
        %v1273 = vpack.c.b16 %v1272, %v1272
        %1274 = vrot.lane.b32.xlu0 %v1273, 64
        %v1275 = vpop.permute.xlu0 %1274
        %v1277 = vsel %vm833, %v1109, 0
        %v1280 = vsel %vm1117, %v1275, 0
        %1282 = vmatpush.bf16.msra.mxu0 0
        %1283 = vmatpush.bf16.msra.mxu0 0
        %1284 = vmatpush.bf16.msra.mxu0 0
        %1285 = vmatpush.bf16.msra.mxu0 0
        %1286 = vmatpush.bf16.msra.mxu0 0
        %1287 = vmatpush.bf16.msra.mxu0 0
        %1288 = vmatpush.bf16.msra.mxu0 0
        %1289 = vmatpush.bf16.msra.mxu0 %v1280
        %1290 = vmatmul.bf16.gmra.mxu0 %v1277
        %v1291 = vpop.f32.mrf.mxu0
        %v1292 = vadd.f32 0.0, %v1291
        %v1293 = vpop.f32.mrf.mxu0
        %1294 = vdwg.mxu0
        %1297 = vrot.lane.b32.xlu0 %v1177, 8
        %v1298 = vpop.permute.xlu0 %1297
        %1299 = vrot.lane.b32.xlu0 %v1200, 8
        %v1300 = vpop.permute.xlu0 %1299
        %1305 = vrot.lane.b32.xlu0 %v1223, 16
        %v1306 = vpop.permute.xlu0 %1305
        %1307 = vrot.lane.b32.xlu0 %v1246, 16
        %v1308 = vpop.permute.xlu0 %1307
        %1313 = vrot.lane.b32.xlu0 %v1269, 24
        %v1314 = vpop.permute.xlu0 %1313
        %1315 = vrot.lane.b32.xlu0 %v1292, 24
        %v1316 = vpop.permute.xlu0 %1315
        %v1319 = vsel %vm833, %v1131, %v1298
        %v1320 = vsel %vm833, %v1154, %v1300
        %vm1321 = vcmask 130048
        %v1322 = vsel %vm1321, %v1319, %v1306
        %v1323 = vsel %vm1321, %v1320, %v1308
        %vm1324 = vcmask 195584
        %v1325 = vsel %vm1324, %v1322, %v1314
        %v1326 = vsel %vm1324, %v1323, %v1316
        %v1327 = vpack.c.bf16 %v1326, %v1325
        %v1328 = vperm.slane %v690, 3
        %v1333 = vunpack.c.l.b16 %v697
        %v1334 = vunpack.c.l.b16 %v698
        %v1335 = vunpack.c.l.b16 %v699
        %v1336 = vunpack.c.l.b16 %v700
        %v1337 = vpack.c.b16 %v1334, %v1333
        %v1338 = vpack.c.b16 %v1336, %v1335
        %v1342 = vsel %vm738, %v1327, 0
        %1344 = vmatpush.bf16.msra.mxu0 0
        %1345 = vmatpush.bf16.msra.mxu0 0
        %1346 = vmatpush.bf16.msra.mxu0 0
        %1347 = vmatpush.bf16.msra.mxu0 0
        %1348 = vmatpush.bf16.msra.mxu0 0
        %1349 = vmatpush.bf16.msra.mxu0 0
        %1350 = vmatpush.bf16.msra.mxu0 %v1338
        %1351 = vmatpush.bf16.msra.mxu0 %v1337
        %1352 = vmatmul.bf16.gmra.mxu0 %v1342
        %v1353 = vpop.f32.mrf.mxu0
        %v1354 = vadd.f32 %v1328, %v1353
        %v1355 = vpop.f32.mrf.mxu0
        %v1356 = vadd.f32 %v1328, %v1355
        %1357 = vdwg.mxu0
        %v1358 = vadd.f32 %v684, %v1354
        %v1359 = vadd.f32 %v685, %v1356
        %v1360 = vsel %vm738, %v1358, 0.0
        %1361 = vadd.xlane.f32.xlu0 %v1360
        %v1362 = vpop.xlane.xlu0 %1361
        %v1363 = vsel %vm738, %v1359, 0.0
        %1364 = vadd.xlane.f32.xlu0 %v1363
        %v1365 = vpop.xlane.xlu0 %1364
        %v1366 = vrcp.pop 32.0
        %v1367 = vmul.f32 32.0, %v1366
        %v1368 = vsub.f32 1.0, %v1367
        %v1369 = vmul.f32 %v1366, %v1368
        %v1370 = vadd.f32 %v1366, %v1369
        %vm1371 = vweird.f32 %v1366
        %v1372 = vsel %vm1371, %v1366, %v1370
        %v1373 = vmul.f32 %v1362, %v1372
        %v1374 = vmul.f32 %v1365, %v1372
        %v1375 = vsub.f32 %v1358, %v1373
        %v1376 = vsub.f32 %v1359, %v1374
        %v1377 = vmul.f32 %v1375, %v1375
        %v1378 = vmul.f32 %v1376, %v1376
        %v1379 = vsel %vm738, %v1377, 0.0
        %1380 = vadd.xlane.f32.xlu0 %v1379
        %v1381 = vpop.xlane.xlu0 %1380
        %v1382 = vsel %vm738, %v1378, 0.0
        %1383 = vadd.xlane.f32.xlu0 %v1382
        %v1384 = vpop.xlane.xlu0 %1383
        %v1385 = vmul.f32 %v1381, %v1372
        %v1386 = vmul.f32 %v1384, %v1372
        %v1387 = vadd.f32 %v1385, 1e-05
        %v1388 = vadd.f32 %v1386, 1e-05
        %v1389 = vrsqrt.pop %v1387
        %v1390 = vmul.f32 %v1389, %v1387
        %v1391 = vmul.f32 %v1390, %v1389
        %v1392 = vmul.f32 0.5, %v1391
        %v1393 = vsub.f32 1.5, %v1392
        %v1394 = vmul.f32 %v1389, %v1393
        %vm1395 = vweird.f32 %v1387
        %vm1396 = vweird.f32 %v1389
        %vm1397 = vmor %vm1395, %vm1396
        %v1398 = vsel %vm1397, %v1389, %v1394
        %v1399 = vrsqrt.pop %v1388
        %v1400 = vmul.f32 %v1399, %v1388
        %v1401 = vmul.f32 %v1400, %v1399
        %v1402 = vmul.f32 0.5, %v1401
        %v1403 = vsub.f32 1.5, %v1402
        %v1404 = vmul.f32 %v1399, %v1403
        %vm1405 = vweird.f32 %v1388
        %vm1406 = vweird.f32 %v1399
        %vm1407 = vmor %vm1405, %vm1406
        %v1408 = vsel %vm1407, %v1399, %v1404
        %v1409 = vmul.f32 %v1375, %v1398
        %v1410 = vmul.f32 %v1376, %v1408
        %v1411 = vperm.slane %v691, 1
        %v1412 = vmul.f32 %v1409, %v1411
        %v1413 = vmul.f32 %v1410, %v1411
        %v1414 = vperm.slane %v691, 2
        %v1415 = vadd.f32 %v1412, %v1414
        %v1416 = vadd.f32 %v1413, %v1414
        %v1417 = vpack.c.bf16 %v1416, %v1415
        %v1418 = vperm.slane %v690, 4
        %v1423 = vunpack.c.l.b16 %v701
        %v1424 = vunpack.c.l.b16 %v702
        %v1425 = vunpack.c.l.b16 %v703
        %v1426 = vunpack.c.l.b16 %v704
        %v1427 = vpack.c.b16 %v1424, %v1423
        %v1428 = vpack.c.b16 %v1426, %v1425
        %v1432 = vsel %vm738, %v1417, 0
        %1434 = vmatpush.bf16.msra.mxu0 0
        %1435 = vmatpush.bf16.msra.mxu0 0
        %1436 = vmatpush.bf16.msra.mxu0 0
        %1437 = vmatpush.bf16.msra.mxu0 0
        %1438 = vmatpush.bf16.msra.mxu0 0
        %1439 = vmatpush.bf16.msra.mxu0 0
        %1440 = vmatpush.bf16.msra.mxu0 %v1428
        %1441 = vmatpush.bf16.msra.mxu0 %v1427
        %1442 = vmatmul.bf16.gmra.mxu0 %v1432
        %v1443 = vpop.f32.mrf.mxu0
        %v1444 = vadd.f32 %v1418, %v1443
        %v1445 = vpop.f32.mrf.mxu0
        %v1446 = vadd.f32 %v1418, %v1445
        %1447 = vdwg.mxu0
        %v1452 = vunpack.c.l.b16 %v686
        %v1453 = vunpack.c.l.b16 %v687
        %v1454 = vunpack.c.l.b16 %v688
        %v1455 = vunpack.c.l.b16 %v689
        %v1456 = vpack.c.b16 %v1453, %v1452
        %v1457 = vpack.c.b16 %v1455, %v1454
        %v1462 = vunpack.c.l.b16 %v705
        %v1463 = vunpack.c.l.b16 %v706
        %v1464 = vunpack.c.l.b16 %v707
        %v1465 = vunpack.c.l.b16 %v708
        %v1466 = vpack.c.b16 %v1463, %v1462
        %v1467 = vpack.c.b16 %v1465, %v1464
        %v1471 = vsel %vm738, %v1456, 0
        %v1474 = vsel %vm738, %v1457, 0
        %1476 = vmatpush.bf16.msra.mxu0 0
        %1477 = vmatpush.bf16.msra.mxu0 0
        %1478 = vmatpush.bf16.msra.mxu0 0
        %1479 = vmatpush.bf16.msra.mxu0 0
        %1480 = vmatpush.bf16.msra.mxu0 0
        %1481 = vmatpush.bf16.msra.mxu0 0
        %1482 = vmatpush.bf16.msra.mxu0 %v1467
        %1483 = vmatpush.bf16.msra.mxu0 %v1466
        %1484 = vmatmul.bf16.gmra.mxu0 %v1471
        %v1485 = vpop.f32.mrf.mxu0
        %v1486 = vadd.f32 0.0, %v1485
        %v1487 = vpop.f32.mrf.mxu0
        %v1488 = vadd.f32 0.0, %v1487
        %1489 = vmatmul.bf16.gmra.mxu0 %v1474
        %v1490 = vpop.f32.mrf.mxu0
        %v1491 = vadd.f32 0.0, %v1490
        %v1492 = vpop.f32.mrf.mxu0
        %v1493 = vadd.f32 0.0, %v1492
        %1494 = vdwg.mxu0
        %v1495 = vperm.slane %v690, 5
        %v1496 = vadd.f32 %v1486, %v1495
        %v1497 = vadd.f32 %v1488, %v1495
        %v1498 = vadd.f32 %v1491, %v1495
        %v1499 = vadd.f32 %v1493, %v1495
        %v1500 = vperm.slane %v690, 6
        %1502 = vrot.lane.b32.xlu0 %v1500, 32
        %v1503 = vpop.permute.xlu0 %1502
        %v1505 = vadd.f32 %v1486, %v1503
        %v1506 = vadd.f32 %v1488, %v1503
        %v1507 = vadd.f32 %v1491, %v1503
        %v1508 = vadd.f32 %v1493, %v1503
        %v1509 = vmul.f32 %v1444, 0.35355338
        %v1510 = vmul.f32 %v1446, 0.35355338
        %v1511 = vpack.c.bf16 %v1509, %v1509
        %v1512 = vpack.c.bf16 %v1510, %v1510
        %v1513 = vpack.c.bf16 %v1496, %v1496
        %v1514 = vpack.c.bf16 %v1497, %v1497
        %v1515 = vpack.c.bf16 %v1498, %v1498
        %v1516 = vpack.c.bf16 %v1499, %v1499
        %v1517 = vpack.c.bf16 %v1505, %v1505
        %v1518 = vpack.c.bf16 %v1506, %v1506
        %v1519 = vpack.c.bf16 %v1507, %v1507
        %v1520 = vpack.c.bf16 %v1508, %v1508
        %1523 = vrot.lane.b32.xlu0 %v1511, 120
        %v1524 = vpop.permute.xlu0 %1523
        %1525 = vrot.lane.b32.xlu0 %v1512, 120
        %v1526 = vpop.permute.xlu0 %1525
        %1527 = vrot.lane.b32.xlu0 %v1511, 112
        %v1528 = vpop.permute.xlu0 %1527
        %1529 = vrot.lane.b32.xlu0 %v1512, 112
        %v1530 = vpop.permute.xlu0 %1529
        %1531 = vrot.lane.b32.xlu0 %v1511, 104
        %v1532 = vpop.permute.xlu0 %1531
        %1533 = vrot.lane.b32.xlu0 %v1512, 104
        %v1534 = vpop.permute.xlu0 %1533
        %1539 = vrot.lane.b32.xlu0 %v1513, 120
        %v1540 = vpop.permute.xlu0 %1539
        %1541 = vrot.lane.b32.xlu0 %v1514, 120
        %v1542 = vpop.permute.xlu0 %1541
        %1543 = vrot.lane.b32.xlu0 %v1515, 120
        %v1544 = vpop.permute.xlu0 %1543
        %1545 = vrot.lane.b32.xlu0 %v1516, 120
        %v1546 = vpop.permute.xlu0 %1545
        %1547 = vrot.lane.b32.xlu0 %v1513, 112
        %v1548 = vpop.permute.xlu0 %1547
        %1549 = vrot.lane.b32.xlu0 %v1514, 112
        %v1550 = vpop.permute.xlu0 %1549
        %1551 = vrot.lane.b32.xlu0 %v1515, 112
        %v1552 = vpop.permute.xlu0 %1551
        %1553 = vrot.lane.b32.xlu0 %v1516, 112
        %v1554 = vpop.permute.xlu0 %1553
        %1555 = vrot.lane.b32.xlu0 %v1513, 104
        %v1556 = vpop.permute.xlu0 %1555
        %1557 = vrot.lane.b32.xlu0 %v1514, 104
        %v1558 = vpop.permute.xlu0 %1557
        %1559 = vrot.lane.b32.xlu0 %v1515, 104
        %v1560 = vpop.permute.xlu0 %1559
        %1561 = vrot.lane.b32.xlu0 %v1516, 104
        %v1562 = vpop.permute.xlu0 %1561
        %1567 = vrot.lane.b32.xlu0 %v1517, 120
        %v1568 = vpop.permute.xlu0 %1567
        %1569 = vrot.lane.b32.xlu0 %v1518, 120
        %v1570 = vpop.permute.xlu0 %1569
        %1571 = vrot.lane.b32.xlu0 %v1519, 120
        %v1572 = vpop.permute.xlu0 %1571
        %1573 = vrot.lane.b32.xlu0 %v1520, 120
        %v1574 = vpop.permute.xlu0 %1573
        %1575 = vrot.lane.b32.xlu0 %v1517, 112
        %v1576 = vpop.permute.xlu0 %1575
        %1577 = vrot.lane.b32.xlu0 %v1518, 112
        %v1578 = vpop.permute.xlu0 %1577
        %1579 = vrot.lane.b32.xlu0 %v1519, 112
        %v1580 = vpop.permute.xlu0 %1579
        %1581 = vrot.lane.b32.xlu0 %v1520, 112
        %v1582 = vpop.permute.xlu0 %1581
        %1583 = vrot.lane.b32.xlu0 %v1517, 104
        %v1584 = vpop.permute.xlu0 %1583
        %1585 = vrot.lane.b32.xlu0 %v1518, 104
        %v1586 = vpop.permute.xlu0 %1585
        %1587 = vrot.lane.b32.xlu0 %v1519, 104
        %v1588 = vpop.permute.xlu0 %1587
        %1589 = vrot.lane.b32.xlu0 %v1520, 104
        %v1590 = vpop.permute.xlu0 %1589
        %v1591 = vunpack.c.l.b16 %v1513
        %v1592 = vunpack.c.l.b16 %v1514
        %v1593 = vpack.c.b16 %v1592, %v1591
        %v1595 = vsel %vm833, %v1511, 0
        %v1598 = vsel %vm833, %v1593, 0
        %1600 = vmatpush.bf16.xpose.msra.mxu0 0
        %1601 = vmatpush.bf16.xpose.msra.mxu0 0
        %1602 = vmatpush.bf16.xpose.msra.mxu0 0
        %1603 = vmatpush.bf16.xpose.msra.mxu0 0
        %1604 = vmatpush.bf16.xpose.msra.mxu0 0
        %1605 = vmatpush.bf16.xpose.msra.mxu0 0
        %1606 = vmatpush.bf16.xpose.msra.mxu0 0
        %1607 = vmatpush.bf16.xpose.msra.mxu0 %v1598
        %1608 = vmatmul.bf16.gmra.mxu0 %v1595
        %v1609 = vpop.f32.mrf.mxu0
        %v1610 = vadd.f32 0.0, %v1609
        %v1611 = vpop.f32.mrf.mxu0
        %1612 = vdwg.mxu0
        %v1613 = vunpack.c.l.b16 %v1515
        %v1614 = vunpack.c.l.b16 %v1516
        %v1615 = vpack.c.b16 %v1614, %v1613
        %v1617 = vsel %vm833, %v1512, 0
        %v1620 = vsel %vm833, %v1615, 0
        %1622 = vmatpush.bf16.xpose.msra.mxu0 0
        %1623 = vmatpush.bf16.xpose.msra.mxu0 0
        %1624 = vmatpush.bf16.xpose.msra.mxu0 0
        %1625 = vmatpush.bf16.xpose.msra.mxu0 0
        %1626 = vmatpush.bf16.xpose.msra.mxu0 0
        %1627 = vmatpush.bf16.xpose.msra.mxu0 0
        %1628 = vmatpush.bf16.xpose.msra.mxu0 0
        %1629 = vmatpush.bf16.xpose.msra.mxu0 %v1620
        %1630 = vmatmul.bf16.gmra.mxu0 %v1617
        %v1631 = vpop.f32.mrf.mxu0
        %v1632 = vadd.f32 0.0, %v1631
        %v1633 = vpop.f32.mrf.mxu0
        %1634 = vdwg.mxu0
        %v1635 = vunpack.c.l.b16 %v1540
        %v1636 = vunpack.c.l.b16 %v1542
        %v1637 = vpack.c.b16 %v1636, %v1635
        %v1639 = vsel %vm833, %v1524, 0
        %v1642 = vsel %vm833, %v1637, 0
        %1644 = vmatpush.bf16.xpose.msra.mxu0 0
        %1645 = vmatpush.bf16.xpose.msra.mxu0 0
        %1646 = vmatpush.bf16.xpose.msra.mxu0 0
        %1647 = vmatpush.bf16.xpose.msra.mxu0 0
        %1648 = vmatpush.bf16.xpose.msra.mxu0 0
        %1649 = vmatpush.bf16.xpose.msra.mxu0 0
        %1650 = vmatpush.bf16.xpose.msra.mxu0 0
        %1651 = vmatpush.bf16.xpose.msra.mxu0 %v1642
        %1652 = vmatmul.bf16.gmra.mxu0 %v1639
        %v1653 = vpop.f32.mrf.mxu0
        %v1654 = vadd.f32 0.0, %v1653
        %v1655 = vpop.f32.mrf.mxu0
        %1656 = vdwg.mxu0
        %v1657 = vunpack.c.l.b16 %v1544
        %v1658 = vunpack.c.l.b16 %v1546
        %v1659 = vpack.c.b16 %v1658, %v1657
        %v1661 = vsel %vm833, %v1526, 0
        %v1664 = vsel %vm833, %v1659, 0
        %1666 = vmatpush.bf16.xpose.msra.mxu0 0
        %1667 = vmatpush.bf16.xpose.msra.mxu0 0
        %1668 = vmatpush.bf16.xpose.msra.mxu0 0
        %1669 = vmatpush.bf16.xpose.msra.mxu0 0
        %1670 = vmatpush.bf16.xpose.msra.mxu0 0
        %1671 = vmatpush.bf16.xpose.msra.mxu0 0
        %1672 = vmatpush.bf16.xpose.msra.mxu0 0
        %1673 = vmatpush.bf16.xpose.msra.mxu0 %v1664
        %1674 = vmatmul.bf16.gmra.mxu0 %v1661
        %v1675 = vpop.f32.mrf.mxu0
        %v1676 = vadd.f32 0.0, %v1675
        %v1677 = vpop.f32.mrf.mxu0
        %1678 = vdwg.mxu0
        %v1679 = vunpack.c.l.b16 %v1548
        %v1680 = vunpack.c.l.b16 %v1550
        %v1681 = vpack.c.b16 %v1680, %v1679
        %v1683 = vsel %vm833, %v1528, 0
        %v1686 = vsel %vm833, %v1681, 0
        %1688 = vmatpush.bf16.xpose.msra.mxu0 0
        %1689 = vmatpush.bf16.xpose.msra.mxu0 0
        %1690 = vmatpush.bf16.xpose.msra.mxu0 0
        %1691 = vmatpush.bf16.xpose.msra.mxu0 0
        %1692 = vmatpush.bf16.xpose.msra.mxu0 0
        %1693 = vmatpush.bf16.xpose.msra.mxu0 0
        %1694 = vmatpush.bf16.xpose.msra.mxu0 0
        %1695 = vmatpush.bf16.xpose.msra.mxu0 %v1686
        %1696 = vmatmul.bf16.gmra.mxu0 %v1683
        %v1697 = vpop.f32.mrf.mxu0
        %v1698 = vadd.f32 0.0, %v1697
        %v1699 = vpop.f32.mrf.mxu0
        %1700 = vdwg.mxu0
        %v1701 = vunpack.c.l.b16 %v1552
        %v1702 = vunpack.c.l.b16 %v1554
        %v1703 = vpack.c.b16 %v1702, %v1701
        %v1705 = vsel %vm833, %v1530, 0
        %v1708 = vsel %vm833, %v1703, 0
        %1710 = vmatpush.bf16.xpose.msra.mxu0 0
        %1711 = vmatpush.bf16.xpose.msra.mxu0 0
        %1712 = vmatpush.bf16.xpose.msra.mxu0 0
        %1713 = vmatpush.bf16.xpose.msra.mxu0 0
        %1714 = vmatpush.bf16.xpose.msra.mxu0 0
        %1715 = vmatpush.bf16.xpose.msra.mxu0 0
        %1716 = vmatpush.bf16.xpose.msra.mxu0 0
        %1717 = vmatpush.bf16.xpose.msra.mxu0 %v1708
        %1718 = vmatmul.bf16.gmra.mxu0 %v1705
        %v1719 = vpop.f32.mrf.mxu0
        %v1720 = vadd.f32 0.0, %v1719
        %v1721 = vpop.f32.mrf.mxu0
        %1722 = vdwg.mxu0
        %v1723 = vunpack.c.l.b16 %v1556
        %v1724 = vunpack.c.l.b16 %v1558
        %v1725 = vpack.c.b16 %v1724, %v1723
        %v1727 = vsel %vm833, %v1532, 0
        %v1730 = vsel %vm833, %v1725, 0
        %1732 = vmatpush.bf16.xpose.msra.mxu0 0
        %1733 = vmatpush.bf16.xpose.msra.mxu0 0
        %1734 = vmatpush.bf16.xpose.msra.mxu0 0
        %1735 = vmatpush.bf16.xpose.msra.mxu0 0
        %1736 = vmatpush.bf16.xpose.msra.mxu0 0
        %1737 = vmatpush.bf16.xpose.msra.mxu0 0
        %1738 = vmatpush.bf16.xpose.msra.mxu0 0
        %1739 = vmatpush.bf16.xpose.msra.mxu0 %v1730
        %1740 = vmatmul.bf16.gmra.mxu0 %v1727
        %v1741 = vpop.f32.mrf.mxu0
        %v1742 = vadd.f32 0.0, %v1741
        %v1743 = vpop.f32.mrf.mxu0
        %1744 = vdwg.mxu0
        %v1745 = vunpack.c.l.b16 %v1560
        %v1746 = vunpack.c.l.b16 %v1562
        %v1747 = vpack.c.b16 %v1746, %v1745
        %v1749 = vsel %vm833, %v1534, 0
        %v1752 = vsel %vm833, %v1747, 0
        %1754 = vmatpush.bf16.xpose.msra.mxu0 0
        %1755 = vmatpush.bf16.xpose.msra.mxu0 0
        %1756 = vmatpush.bf16.xpose.msra.mxu0 0
        %1757 = vmatpush.bf16.xpose.msra.mxu0 0
        %1758 = vmatpush.bf16.xpose.msra.mxu0 0
        %1759 = vmatpush.bf16.xpose.msra.mxu0 0
        %1760 = vmatpush.bf16.xpose.msra.mxu0 0
        %1761 = vmatpush.bf16.xpose.msra.mxu0 %v1752
        %1762 = vmatmul.bf16.gmra.mxu0 %v1749
        %v1763 = vpop.f32.mrf.mxu0
        %v1764 = vadd.f32 0.0, %v1763
        %v1765 = vpop.f32.mrf.mxu0
        %1766 = vdwg.mxu0
        %v1767 = vsel %vm1321, %v1610, -inf
        %1768 = vmax.xlane.f32.xlu0 %v1767
        %v1769 = vpop.xlane.xlu0 %1768
        %v1770 = vsel %vm1321, %v1632, -inf
        %1771 = vmax.xlane.f32.xlu0 %v1770
        %v1772 = vpop.xlane.xlu0 %1771
        %v1773 = vsel %vm1321, %v1654, -inf
        %1774 = vmax.xlane.f32.xlu0 %v1773
        %v1775 = vpop.xlane.xlu0 %1774
        %v1776 = vsel %vm1321, %v1676, -inf
        %1777 = vmax.xlane.f32.xlu0 %v1776
        %v1778 = vpop.xlane.xlu0 %1777
        %v1779 = vsel %vm1321, %v1698, -inf
        %1780 = vmax.xlane.f32.xlu0 %v1779
        %v1781 = vpop.xlane.xlu0 %1780
        %v1782 = vsel %vm1321, %v1720, -inf
        %1783 = vmax.xlane.f32.xlu0 %v1782
        %v1784 = vpop.xlane.xlu0 %1783
        %v1785 = vsel %vm1321, %v1742, -inf
        %1786 = vmax.xlane.f32.xlu0 %v1785
        %v1787 = vpop.xlane.xlu0 %1786
        %v1788 = vsel %vm1321, %v1764, -inf
        %1789 = vmax.xlane.f32.xlu0 %v1788
        %v1790 = vpop.xlane.xlu0 %1789
        %v1791 = vsub.f32 %v1610, %v1769
        %v1792 = vsub.f32 %v1632, %v1772
        %v1793 = vsub.f32 %v1654, %v1775
        %v1794 = vsub.f32 %v1676, %v1778
        %v1795 = vsub.f32 %v1698, %v1781
        %v1796 = vsub.f32 %v1720, %v1784
        %v1797 = vsub.f32 %v1742, %v1787
        %v1798 = vsub.f32 %v1764, %v1790
        %v1799 = vmul.f32 %v1791, 1.442695
        %v1800 = vpow.pop %v1799
        %v1801 = vmul.f32 %v1792, 1.442695
        %v1802 = vpow.pop %v1801
        %v1803 = vmul.f32 %v1793, 1.442695
        %v1804 = vpow.pop %v1803
        %v1805 = vmul.f32 %v1794, 1.442695
        %v1806 = vpow.pop %v1805
        %v1807 = vmul.f32 %v1795, 1.442695
        %v1808 = vpow.pop %v1807
        %v1809 = vmul.f32 %v1796, 1.442695
        %v1810 = vpow.pop %v1809
        %v1811 = vmul.f32 %v1797, 1.442695
        %v1812 = vpow.pop %v1811
        %v1813 = vmul.f32 %v1798, 1.442695
        %v1814 = vpow.pop %v1813
        %v1815 = vsel %vm1321, %v1800, 0.0
        %1816 = vadd.xlane.f32.xlu0 %v1815
        %v1817 = vpop.xlane.xlu0 %1816
        %v1818 = vsel %vm1321, %v1802, 0.0
        %1819 = vadd.xlane.f32.xlu0 %v1818
        %v1820 = vpop.xlane.xlu0 %1819
        %v1821 = vsel %vm1321, %v1804, 0.0
        %1822 = vadd.xlane.f32.xlu0 %v1821
        %v1823 = vpop.xlane.xlu0 %1822
        %v1824 = vsel %vm1321, %v1806, 0.0
        %1825 = vadd.xlane.f32.xlu0 %v1824
        %v1826 = vpop.xlane.xlu0 %1825
        %v1827 = vsel %vm1321, %v1808, 0.0
        %1828 = vadd.xlane.f32.xlu0 %v1827
        %v1829 = vpop.xlane.xlu0 %1828
        %v1830 = vsel %vm1321, %v1810, 0.0
        %1831 = vadd.xlane.f32.xlu0 %v1830
        %v1832 = vpop.xlane.xlu0 %1831
        %v1833 = vsel %vm1321, %v1812, 0.0
        %1834 = vadd.xlane.f32.xlu0 %v1833
        %v1835 = vpop.xlane.xlu0 %1834
        %v1836 = vsel %vm1321, %v1814, 0.0
        %1837 = vadd.xlane.f32.xlu0 %v1836
        %v1838 = vpop.xlane.xlu0 %1837
        %v1839 = vrcp.pop %v1817
        %v1840 = vrcp.pop %v1820
        %v1841 = vrcp.pop %v1823
        %v1842 = vrcp.pop %v1826
        %v1843 = vrcp.pop %v1829
        %v1844 = vrcp.pop %v1832
        %v1845 = vrcp.pop %v1835
        %v1846 = vrcp.pop %v1838
        %v1847 = vmul.f32 %v1800, %v1839
        %v1848 = vmul.f32 %v1802, %v1840
        %v1849 = vmul.f32 %v1804, %v1841
        %v1850 = vmul.f32 %v1806, %v1842
        %v1851 = vmul.f32 %v1808, %v1843
        %v1852 = vmul.f32 %v1810, %v1844
        %v1853 = vmul.f32 %v1812, %v1845
        %v1854 = vmul.f32 %v1814, %v1846
        %v1855 = vpack.c.bf16 %v1847, %v1847
        %v1856 = vpack.c.bf16 %v1848, %v1848
        %v1857 = vpack.c.bf16 %v1849, %v1849
        %v1858 = vpack.c.bf16 %v1850, %v1850
        %v1859 = vpack.c.bf16 %v1851, %v1851
        %v1860 = vpack.c.bf16 %v1852, %v1852
        %v1861 = vpack.c.bf16 %v1853, %v1853
        %v1862 = vpack.c.bf16 %v1854, %v1854
        %v1863 = vunpack.c.l.b16 %v1517
        %v1864 = vunpack.c.l.b16 %v1518
        %v1865 = vpack.c.b16 %v1864, %v1863
        %1866 = vrot.lane.b32.xlu0 %v1865, 96
        %v1867 = vpop.permute.xlu0 %1866
        %v1870 = vsel %vm1321, %v1855, 0
        %1872 = vmatpush.bf16.msra.mxu0 0
        %1873 = vmatpush.bf16.msra.mxu0 0
        %1874 = vmatpush.bf16.msra.mxu0 0
        %1875 = vmatpush.bf16.msra.mxu0 0
        %1876 = vmatpush.bf16.msra.mxu0 0
        %1877 = vmatpush.bf16.msra.mxu0 0
        %1878 = vmatpush.bf16.msra.mxu0 0
        %1879 = vmatpush.bf16.msra.mxu0 %v1867
        %1880 = vmatmul.bf16.gmra.mxu0 %v1870
        %v1881 = vpop.f32.mrf.mxu0
        %v1882 = vadd.f32 0.0, %v1881
        %v1883 = vpop.f32.mrf.mxu0
        %1884 = vdwg.mxu0
        %v1885 = vunpack.c.l.b16 %v1519
        %v1886 = vunpack.c.l.b16 %v1520
        %v1887 = vpack.c.b16 %v1886, %v1885
        %1888 = vrot.lane.b32.xlu0 %v1887, 96
        %v1889 = vpop.permute.xlu0 %1888
        %v1892 = vsel %vm1321, %v1856, 0
        %1894 = vmatpush.bf16.msra.mxu0 0
        %1895 = vmatpush.bf16.msra.mxu0 0
        %1896 = vmatpush.bf16.msra.mxu0 0
        %1897 = vmatpush.bf16.msra.mxu0 0
        %1898 = vmatpush.bf16.msra.mxu0 0
        %1899 = vmatpush.bf16.msra.mxu0 0
        %1900 = vmatpush.bf16.msra.mxu0 0
        %1901 = vmatpush.bf16.msra.mxu0 %v1889
        %1902 = vmatmul.bf16.gmra.mxu0 %v1892
        %v1903 = vpop.f32.mrf.mxu0
        %v1904 = vadd.f32 0.0, %v1903
        %v1905 = vpop.f32.mrf.mxu0
        %1906 = vdwg.mxu0
        %v1907 = vunpack.c.l.b16 %v1568
        %v1908 = vunpack.c.l.b16 %v1570
        %v1909 = vpack.c.b16 %v1908, %v1907
        %1910 = vrot.lane.b32.xlu0 %v1909, 96
        %v1911 = vpop.permute.xlu0 %1910
        %v1914 = vsel %vm1321, %v1857, 0
        %1916 = vmatpush.bf16.msra.mxu0 0
        %1917 = vmatpush.bf16.msra.mxu0 0
        %1918 = vmatpush.bf16.msra.mxu0 0
        %1919 = vmatpush.bf16.msra.mxu0 0
        %1920 = vmatpush.bf16.msra.mxu0 0
        %1921 = vmatpush.bf16.msra.mxu0 0
        %1922 = vmatpush.bf16.msra.mxu0 0
        %1923 = vmatpush.bf16.msra.mxu0 %v1911
        %1924 = vmatmul.bf16.gmra.mxu0 %v1914
        %v1925 = vpop.f32.mrf.mxu0
        %v1926 = vadd.f32 0.0, %v1925
        %v1927 = vpop.f32.mrf.mxu0
        %1928 = vdwg.mxu0
        %v1929 = vunpack.c.l.b16 %v1572
        %v1930 = vunpack.c.l.b16 %v1574
        %v1931 = vpack.c.b16 %v1930, %v1929
        %1932 = vrot.lane.b32.xlu0 %v1931, 96
        %v1933 = vpop.permute.xlu0 %1932
        %v1936 = vsel %vm1321, %v1858, 0
        %1938 = vmatpush.bf16.msra.mxu0 0
        %1939 = vmatpush.bf16.msra.mxu0 0
        %1940 = vmatpush.bf16.msra.mxu0 0
        %1941 = vmatpush.bf16.msra.mxu0 0
        %1942 = vmatpush.bf16.msra.mxu0 0
        %1943 = vmatpush.bf16.msra.mxu0 0
        %1944 = vmatpush.bf16.msra.mxu0 0
        %1945 = vmatpush.bf16.msra.mxu0 %v1933
        %1946 = vmatmul.bf16.gmra.mxu0 %v1936
        %v1947 = vpop.f32.mrf.mxu0
        %v1948 = vadd.f32 0.0, %v1947
        %v1949 = vpop.f32.mrf.mxu0
        %1950 = vdwg.mxu0
        %v1951 = vunpack.c.l.b16 %v1576
        %v1952 = vunpack.c.l.b16 %v1578
        %v1953 = vpack.c.b16 %v1952, %v1951
        %1954 = vrot.lane.b32.xlu0 %v1953, 96
        %v1955 = vpop.permute.xlu0 %1954
        %v1958 = vsel %vm1321, %v1859, 0
        %1960 = vmatpush.bf16.msra.mxu0 0
        %1961 = vmatpush.bf16.msra.mxu0 0
        %1962 = vmatpush.bf16.msra.mxu0 0
        %1963 = vmatpush.bf16.msra.mxu0 0
        %1964 = vmatpush.bf16.msra.mxu0 0
        %1965 = vmatpush.bf16.msra.mxu0 0
        %1966 = vmatpush.bf16.msra.mxu0 0
        %1967 = vmatpush.bf16.msra.mxu0 %v1955
        %1968 = vmatmul.bf16.gmra.mxu0 %v1958
        %v1969 = vpop.f32.mrf.mxu0
        %v1970 = vadd.f32 0.0, %v1969
        %v1971 = vpop.f32.mrf.mxu0
        %1972 = vdwg.mxu0
        %v1973 = vunpack.c.l.b16 %v1580
        %v1974 = vunpack.c.l.b16 %v1582
        %v1975 = vpack.c.b16 %v1974, %v1973
        %1976 = vrot.lane.b32.xlu0 %v1975, 96
        %v1977 = vpop.permute.xlu0 %1976
        %v1980 = vsel %vm1321, %v1860, 0
        %1982 = vmatpush.bf16.msra.mxu0 0
        %1983 = vmatpush.bf16.msra.mxu0 0
        %1984 = vmatpush.bf16.msra.mxu0 0
        %1985 = vmatpush.bf16.msra.mxu0 0
        %1986 = vmatpush.bf16.msra.mxu0 0
        %1987 = vmatpush.bf16.msra.mxu0 0
        %1988 = vmatpush.bf16.msra.mxu0 0
        %1989 = vmatpush.bf16.msra.mxu0 %v1977
        %1990 = vmatmul.bf16.gmra.mxu0 %v1980
        %v1991 = vpop.f32.mrf.mxu0
        %v1992 = vadd.f32 0.0, %v1991
        %v1993 = vpop.f32.mrf.mxu0
        %1994 = vdwg.mxu0
        %v1995 = vunpack.c.l.b16 %v1584
        %v1996 = vunpack.c.l.b16 %v1586
        %v1997 = vpack.c.b16 %v1996, %v1995
        %1998 = vrot.lane.b32.xlu0 %v1997, 96
        %v1999 = vpop.permute.xlu0 %1998
        %v2002 = vsel %vm1321, %v1861, 0
        %2004 = vmatpush.bf16.msra.mxu0 0
        %2005 = vmatpush.bf16.msra.mxu0 0
        %2006 = vmatpush.bf16.msra.mxu0 0
        %2007 = vmatpush.bf16.msra.mxu0 0
        %2008 = vmatpush.bf16.msra.mxu0 0
        %2009 = vmatpush.bf16.msra.mxu0 0
        %2010 = vmatpush.bf16.msra.mxu0 0
        %2011 = vmatpush.bf16.msra.mxu0 %v1999
        %2012 = vmatmul.bf16.gmra.mxu0 %v2002
        %v2013 = vpop.f32.mrf.mxu0
        %v2014 = vadd.f32 0.0, %v2013
        %v2015 = vpop.f32.mrf.mxu0
        %2016 = vdwg.mxu0
        %v2017 = vunpack.c.l.b16 %v1588
        %v2018 = vunpack.c.l.b16 %v1590
        %v2019 = vpack.c.b16 %v2018, %v2017
        %2020 = vrot.lane.b32.xlu0 %v2019, 96
        %v2021 = vpop.permute.xlu0 %2020
        %v2024 = vsel %vm1321, %v1862, 0
        %2026 = vmatpush.bf16.msra.mxu0 0
        %2027 = vmatpush.bf16.msra.mxu0 0
        %2028 = vmatpush.bf16.msra.mxu0 0
        %2029 = vmatpush.bf16.msra.mxu0 0
        %2030 = vmatpush.bf16.msra.mxu0 0
        %2031 = vmatpush.bf16.msra.mxu0 0
        %2032 = vmatpush.bf16.msra.mxu0 0
        %2033 = vmatpush.bf16.msra.mxu0 %v2021
        %2034 = vmatmul.bf16.gmra.mxu0 %v2024
        %v2035 = vpop.f32.mrf.mxu0
        %v2036 = vadd.f32 0.0, %v2035
        %v2037 = vpop.f32.mrf.mxu0
        %2038 = vdwg.mxu0
        %2041 = vrot.lane.b32.xlu0 %v1926, 8
        %v2042 = vpop.permute.xlu0 %2041
        %2043 = vrot.lane.b32.xlu0 %v1948, 8
        %v2044 = vpop.permute.xlu0 %2043
        %2049 = vrot.lane.b32.xlu0 %v1970, 16
        %v2050 = vpop.permute.xlu0 %2049
        %2051 = vrot.lane.b32.xlu0 %v1992, 16
        %v2052 = vpop.permute.xlu0 %2051
        %2057 = vrot.lane.b32.xlu0 %v2014, 24
        %v2058 = vpop.permute.xlu0 %2057
        %2059 = vrot.lane.b32.xlu0 %v2036, 24
        %v2060 = vpop.permute.xlu0 %2059
        %v2063 = vsel %vm833, %v1882, %v2042
        %v2064 = vsel %vm833, %v1904, %v2044
        %v2065 = vsel %vm1321, %v2063, %v2050
        %v2066 = vsel %vm1321, %v2064, %v2052
        %v2067 = vsel %vm1324, %v2065, %v2058
        %v2068 = vsel %vm1324, %v2066, %v2060
        %v2069 = vpack.c.bf16 %v2068, %v2067
        %v2070 = vperm.slane %v690, 7
        %v2075 = vunpack.c.l.b16 %v709
        %v2076 = vunpack.c.l.b16 %v710
        %v2077 = vunpack.c.l.b16 %v711
        %v2078 = vunpack.c.l.b16 %v712
        %v2079 = vpack.c.b16 %v2076, %v2075
        %v2080 = vpack.c.b16 %v2078, %v2077
        %v2084 = vsel %vm738, %v2069, 0
        %2086 = vmatpush.bf16.msra.mxu0 0
        %2087 = vmatpush.bf16.msra.mxu0 0
        %2088 = vmatpush.bf16.msra.mxu0 0
        %2089 = vmatpush.bf16.msra.mxu0 0
        %2090 = vmatpush.bf16.msra.mxu0 0
        %2091 = vmatpush.bf16.msra.mxu0 0
        %2092 = vmatpush.bf16.msra.mxu0 %v2080
        %2093 = vmatpush.bf16.msra.mxu0 %v2079
        %2094 = vmatmul.bf16.gmra.mxu0 %v2084
        %v2095 = vpop.f32.mrf.mxu0
        %v2096 = vadd.f32 %v2070, %v2095
        %v2097 = vpop.f32.mrf.mxu0
        %v2098 = vadd.f32 %v2070, %v2097
        %2099 = vdwg.mxu0
        %v2100 = vadd.f32 %v1415, %v2096
        %v2101 = vadd.f32 %v1416, %v2098
        %v2102 = vsel %vm738, %v2100, 0.0
        %2103 = vadd.xlane.f32.xlu0 %v2102
        %v2104 = vpop.xlane.xlu0 %2103
        %v2105 = vsel %vm738, %v2101, 0.0
        %2106 = vadd.xlane.f32.xlu0 %v2105
        %v2107 = vpop.xlane.xlu0 %2106
        %v2108 = vmul.f32 %v2104, %v1372
        %v2109 = vmul.f32 %v2107, %v1372
        %v2110 = vsub.f32 %v2100, %v2108
        %v2111 = vsub.f32 %v2101, %v2109
        %v2112 = vmul.f32 %v2110, %v2110
        %v2113 = vmul.f32 %v2111, %v2111
        %v2114 = vsel %vm738, %v2112, 0.0
        %2115 = vadd.xlane.f32.xlu0 %v2114
        %v2116 = vpop.xlane.xlu0 %2115
        %v2117 = vsel %vm738, %v2113, 0.0
        %2118 = vadd.xlane.f32.xlu0 %v2117
        %v2119 = vpop.xlane.xlu0 %2118
        %v2120 = vmul.f32 %v2116, %v1372
        %v2121 = vmul.f32 %v2119, %v1372
        %v2122 = vadd.f32 %v2120, 1e-05
        %v2123 = vadd.f32 %v2121, 1e-05
        %v2124 = vrsqrt.pop %v2122
        %v2125 = vmul.f32 %v2124, %v2122
        %v2126 = vmul.f32 %v2125, %v2124
        %v2127 = vmul.f32 0.5, %v2126
        %v2128 = vsub.f32 1.5, %v2127
        %v2129 = vmul.f32 %v2124, %v2128
        %vm2130 = vweird.f32 %v2122
        %vm2131 = vweird.f32 %v2124
        %vm2132 = vmor %vm2130, %vm2131
        %v2133 = vsel %vm2132, %v2124, %v2129
        %v2134 = vrsqrt.pop %v2123
        %v2135 = vmul.f32 %v2134, %v2123
        %v2136 = vmul.f32 %v2135, %v2134
        %v2137 = vmul.f32 0.5, %v2136
        %v2138 = vsub.f32 1.5, %v2137
        %v2139 = vmul.f32 %v2134, %v2138
        %vm2140 = vweird.f32 %v2123
        %vm2141 = vweird.f32 %v2134
        %vm2142 = vmor %vm2140, %vm2141
        %v2143 = vsel %vm2142, %v2134, %v2139
        %v2144 = vmul.f32 %v2110, %v2133
        %v2145 = vmul.f32 %v2111, %v2143
        %v2146 = vperm.slane %v691, 3
        %v2147 = vmul.f32 %v2144, %v2146
        %v2148 = vmul.f32 %v2145, %v2146
        %v2149 = vperm.slane %v691, 4
        %v2150 = vadd.f32 %v2147, %v2149
        %v2151 = vadd.f32 %v2148, %v2149
        %v2152 = vpack.c.bf16 %v2151, %v2150
        %v2154 = vperm.slane %v692, 0
        %v2160 = vunpack.c.l.b16 %v713
        %v2161 = vunpack.c.l.b16 %v714
        %v2162 = vunpack.c.l.b16 %v715
        %v2163 = vunpack.c.l.b16 %v716
        %v2164 = vpack.c.b16 %v2161, %v2160
        %v2165 = vpack.c.b16 %v2163, %v2162
        %v2169 = vsel %vm738, %v2152, 0
        %2171 = vmatpush.bf16.msra.mxu0 0
        %2172 = vmatpush.bf16.msra.mxu0 0
        %2173 = vmatpush.bf16.msra.mxu0 0
        %2174 = vmatpush.bf16.msra.mxu0 0
        %2175 = vmatpush.bf16.msra.mxu0 0
        %2176 = vmatpush.bf16.msra.mxu0 0
        %2177 = vmatpush.bf16.msra.mxu0 %v2165
        %2178 = vmatpush.bf16.msra.mxu0 %v2164
        %2179 = vmatmul.bf16.gmra.mxu0 %v2169
        %v2180 = vpop.f32.mrf.mxu0
        %v2181 = vadd.f32 %v2154, %v2180
        %v2182 = vpop.f32.mrf.mxu0
        %v2183 = vadd.f32 %v2154, %v2182
        %2184 = vdwg.mxu0
        %v2185 = vmax.f32 %v2181, 0.0
        %v2186 = vmax.f32 %v2183, 0.0
        %v2187 = vpack.c.bf16 %v2186, %v2185
        %v2188 = vperm.slane %v691, 0
        %v2197 = vunpack.c.l.b16 %v717
        %v2198 = vunpack.c.l.b16 %v718
        %v2199 = vunpack.c.l.b16 %v719
        %v2200 = vunpack.c.l.b16 %v720
        %v2201 = vunpack.c.l.b16 %v721
        %v2202 = vunpack.c.l.b16 %v722
        %v2203 = vunpack.c.l.b16 %v723
        %v2204 = vunpack.c.l.b16 %v724
        %v2205 = vpack.c.b16 %v2198, %v2197
        %v2206 = vpack.c.b16 %v2200, %v2199
        %v2207 = vpack.c.b16 %v2202, %v2201
        %v2208 = vpack.c.b16 %v2204, %v2203
        %vm2213 = vcmask 523264
        %v2215 = vsel %vm2213, %v2187, 0
        %2217 = vmatpush.bf16.msra.mxu0 0
        %2218 = vmatpush.bf16.msra.mxu0 0
        %2219 = vmatpush.bf16.msra.mxu0 0
        %2220 = vmatpush.bf16.msra.mxu0 0
        %2221 = vmatpush.bf16.msra.mxu0 %v2208
        %2222 = vmatpush.bf16.msra.mxu0 %v2207
        %2223 = vmatpush.bf16.msra.mxu0 %v2206
        %2224 = vmatpush.bf16.msra.mxu0 %v2205
        %2225 = vmatmul.bf16.gmra.mxu0 %v2215
        %v2226 = vpop.f32.mrf.mxu0
        %v2227 = vadd.f32 %v2188, %v2226
        %v2228 = vpop.f32.mrf.mxu0
        %v2229 = vadd.f32 %v2188, %v2228
        %2230 = vdwg.mxu0
        %v2231 = vadd.f32 %v2150, %v2227
        %v2232 = vadd.f32 %v2151, %v2229
        %v2233 = vsel %vm738, %v2231, 0.0
        %2234 = vadd.xlane.f32.xlu0 %v2233
        %v2235 = vpop.xlane.xlu0 %2234
        %v2236 = vsel %vm738, %v2232, 0.0
        %2237 = vadd.xlane.f32.xlu0 %v2236
        %v2238 = vpop.xlane.xlu0 %2237
        %v2239 = vmul.f32 %v2235, %v1372
        %v2240 = vmul.f32 %v2238, %v1372
        %v2241 = vsub.f32 %v2231, %v2239
        %v2242 = vsub.f32 %v2232, %v2240
        %v2243 = vmul.f32 %v2241, %v2241
        %v2244 = vmul.f32 %v2242, %v2242
        %v2245 = vsel %vm738, %v2243, 0.0
        %2246 = vadd.xlane.f32.xlu0 %v2245
        %v2247 = vpop.xlane.xlu0 %2246
        %v2248 = vsel %vm738, %v2244, 0.0
        %2249 = vadd.xlane.f32.xlu0 %v2248
        %v2250 = vpop.xlane.xlu0 %2249
        %v2251 = vmul.f32 %v2247, %v1372
        %v2252 = vmul.f32 %v2250, %v1372
        %v2253 = vadd.f32 %v2251, 1e-05
        %v2254 = vadd.f32 %v2252, 1e-05
        %v2255 = vrsqrt.pop %v2253
        %v2256 = vmul.f32 %v2255, %v2253
        %v2257 = vmul.f32 %v2256, %v2255
        %v2258 = vmul.f32 0.5, %v2257
        %v2259 = vsub.f32 1.5, %v2258
        %v2260 = vmul.f32 %v2255, %v2259
        %vm2261 = vweird.f32 %v2253
        %vm2262 = vweird.f32 %v2255
        %vm2263 = vmor %vm2261, %vm2262
        %v2264 = vsel %vm2263, %v2255, %v2260
        %v2265 = vrsqrt.pop %v2254
        %v2266 = vmul.f32 %v2265, %v2254
        %v2267 = vmul.f32 %v2266, %v2265
        %v2268 = vmul.f32 0.5, %v2267
        %v2269 = vsub.f32 1.5, %v2268
        %v2270 = vmul.f32 %v2265, %v2269
        %vm2271 = vweird.f32 %v2254
        %vm2272 = vweird.f32 %v2265
        %vm2273 = vmor %vm2271, %vm2272
        %v2274 = vsel %vm2273, %v2265, %v2270
        %v2275 = vmul.f32 %v2241, %v2264
        %v2276 = vmul.f32 %v2242, %v2274
        %v2277 = vperm.slane %v691, 5
        %v2278 = vmul.f32 %v2275, %v2277
        %v2279 = vmul.f32 %v2276, %v2277
        %v2280 = vperm.slane %v691, 6
        %v2281 = vadd.f32 %v2278, %v2280
        %v2282 = vadd.f32 %v2279, %v2280
        %p2283 = scmp.lt.s32.totalorder %s30, 1
        // Predicated region
        $region93: #{tpu_custom_call.1} parent=63 // pred_check
          %p2284 = pneg %p2283
        $region94: #{tpu_custom_call.1} parent=63 // pred_check_branch
          %2286 = sbr.rel (%p2284) target = $region96
        $region95: #{tpu_custom_call.1} parent=63 // pred_region
          %2287 = vst.msk [vmem:[#allocation2] sm:$0xff] %vm738, %v2281
          %2288 = vst.msk [vmem:[#allocation2 + $0x8] sm:$0xff] %vm738, %v2282
        $region96: #{tpu_custom_call.1} parent=63 // pred_fallthru
          _
        %p2289 = scmp.eq.s32.totalorder %s30, 1
        // Predicated region
        $region97: #{tpu_custom_call.1} parent=63 // pred_check
          %p2290 = pneg %p2289
        $region98: #{tpu_custom_call.1} parent=63 // pred_check_branch
          %2292 = sbr.rel (%p2290) target = $region100
        $region99: #{tpu_custom_call.1} parent=63 // pred_region
          %2293 = vst.msk [vmem:[#allocation12] sm:$0xff] %vm738, %v2281
          %2294 = vst.msk [vmem:[#allocation12 + $0x8] sm:$0xff] %vm738, %v2282
        $region100: #{tpu_custom_call.1} parent=63 // pred_fallthru
          _
        // Predicated region
        $region101: #{tpu_custom_call.1} parent=63 // pred_check
          %p2295 = pneg %p341
        $region102: #{tpu_custom_call.1} parent=63 // pred_check_branch
          %2297 = sbr.rel (%p2295) target = $region104
        $region103: #{tpu_custom_call.1} parent=63 // pred_region
          %s2298 = smul.u32 2, %s29
          %2300 = vsyncadd [#allocation5], 0
          %s2301 = smul.addr %s2298, 8
          %s2302 = scalar_lea.hbm %s11, %s2301
          %s2303 = sshll.u32 [#allocation12], 4
          %s2304 = int_to_ptr.vmem [resolvable:$true] %s2303
          %s2305 = sshll.u32 %s2302, 4
          %s2306 = int_to_ptr.hbm [resolvable:$true] %s2305
          %2311 = dma.vmem_to_hbm [thread:$0]  %s2304, 256, %s2306, [#allocation5], 128, 128, 8
        $region104: #{tpu_custom_call.1} parent=63 // pred_fallthru
          _
        // Predicated region
        $region105: #{tpu_custom_call.1} parent=63 // pred_check
          %p2312 = pneg %p341
        $region106: #{tpu_custom_call.1} parent=63 // pred_check_branch
          %2314 = sbr.rel (%p2312) target = $region108
        $region107: #{tpu_custom_call.1} parent=63 // pred_region
          %2316 = dma.done [#allocation5], 256
        $region108: #{tpu_custom_call.1} parent=63 // pred_fallthru
          _
      $region64: #{tpu_custom_call.1} parent=5 // pred_fallthru
        _
      %p2317 = scmp.le.s32.totalorder 2, %s20
      // Predicated region
      $region109: #{tpu_custom_call.1} parent=5 // pred_check
        %p2318 = pneg %p2317
      $region110: #{tpu_custom_call.1} parent=5 // pred_check_branch
        %2320 = sbr.rel (%p2318) target = $region112
      $region111: #{tpu_custom_call.1} parent=5 // pred_region
        %s2321 = ssub.s32 %s20, 2
      $region112: #{tpu_custom_call.1} parent=5 // pred_fallthru
        _
    $region6: #{tpu_custom_call.1} parent=1 // loop_footer
      %s24 = sadd.s32 1, %s20
    $region7: #{tpu_custom_call.1} parent=1 // loop_footer_branch
      %19 = sbr.rel target = $region3
    $region8: #{tpu_custom_call.1} parent=1 // loop_exit
      _
    %2322 = vsyncpa [#allocation4], 1
    %s2323 = scalar_lea.sflag [#allocation4], 1
    %2324 = vsyncpa %s2323, 1
    %2325 = vsyncpa [#allocation7], 1
    %2326 = vsyncpa [#allocation5], 1
    %s2327 = scalar_lea.sflag [#allocation5], 1
    %2328 = vsyncpa %s2327, 1

</llo_original>
